<compile_context>
chip_gen: v5e
topology: v5e:2x2
jax: 0.10.0
libtpu: 0.0.40
codegen_flags: <defaults>
</compile_context>

<pallas_src>
import functools

import jax
import jax.numpy as jnp
from jax import lax
from jax.experimental import pallas as pl
from jax.experimental.pallas import tpu as pltpu

FEATURES = 4     # `features` constructor arg of RFAM
BN_EPS = 1e-5    # nn.BatchNorm2d default eps


def rfam_kernel(x1_ref, x2_ref, w2v_ref, p_ref, y1_ref, y2_ref, *, N, C, H, W):
    L = H * W
    C2 = 2 * C

    # SMEM packed-parameter offsets (see pack_rfam_params).
    W1_OFF = 0
    GAMMA_OFF = W1_OFF + C * C2
    BETA_OFF = GAMMA_OFF + C
    B2_OFF = BETA_OFF + C

    # Full-slab loads: (N*C, L) with row r = n*C + c (free reshape of NCHW).
    x1v = x1_ref[...]
    x2v = x2_ref[...]

    def chan_plane(xv, ci):
        # (N, L) plane of input channel ci (rows n*C + ci), upcast to f32.
        rows = [xv[n * C + ci: n * C + ci + 1] for n in range(N)]
        r = rows[0] if N == 1 else jnp.concatenate(rows, axis=0)
        return r.astype(jnp.float32)

    # ---- Stage 1: Conv2d(2C, C, 1) -> BatchNorm2d (training-mode batch
    #      stats over N*H*W) -> ReLU.  Scalar SMEM weights * (N, L) planes on
    #      the VPU.  b1 is dropped: a per-channel constant added before
    #      training-mode BN is cancelled exactly by the mean subtraction.
    u = [chan_plane(x1v, ci) for ci in range(C)] + \
        [chan_plane(x2v, ci) for ci in range(C)]

    inv_count = 1.0 / float(N * L)
    y_planes = []
    for co in range(C):
        z = p_ref[W1_OFF + co * C2] * u[0]
        for ci in range(1, C2):
            z = z + p_ref[W1_OFF + co * C2 + ci] * u[ci]
        m = jnp.sum(z) * inv_count
        var = jnp.maximum(jnp.sum(z * z) * inv_count - m * m, 0.0)  # clamp >= 0
        scale = p_ref[GAMMA_OFF + co] * lax.rsqrt(var + BN_EPS)
        bn_shift = p_ref[BETA_OFF + co] - m * scale
        y_planes.append(jnp.maximum(z * scale + bn_shift, 0.0))

    # Pack the hidden channels onto the sublane axis: (C*N, L) slab, row c*N+n.
    y_slab = jnp.concatenate(y_planes, axis=0) if C > 1 else y_planes[0]

    # ---- Stage 2: Conv2d(C, 2, 3, padding=1) (cross-correlation, zero pad)
    #      -> Sigmoid, on the packed slab.  9 taps: one combined lane roll
    #      (shift oh*W + ow, XLU) of the WHOLE slab per tap, one combined
    #      boundary mask, then the tap plane is consumed immediately by both
    #      output-channel accumulators via per-sublane weight vectors
    #      (w2v_ref[co, tap] has shape (C*N, 1)).
    col = lax.broadcasted_iota(jnp.int32, (C * N, L), 1)
    w_idx = (col & (W - 1)) if (W & (W - 1)) == 0 else (col % W)
    hmask = {-1: col >= W, 1: col < L - W}        # row-boundary masks
    wmask = {-1: w_idx >= 1, 1: w_idx <= W - 2}   # col-boundary masks

    CENTER = 1 * 3 + 1
    acc0 = w2v_ref[0, CENTER] * y_slab            # (C*N,1) * (C*N,L) broadcast
    acc1 = w2v_ref[1, CENTER] * y_slab
    for oh in (-1, 0, 1):
        for ow in (-1, 0, 1):
            if oh == 0 and ow == 0:
                continue
            tap = (oh + 1) * 3 + (ow + 1)
            amt = (-(oh * W + ow)) % L            # rolled[l] = y[(l + oh*W + ow) % L]
            plane = pltpu.roll(y_slab, shift=amt, axis=1)
            mask = hmask[oh] if oh != 0 else None
            if ow != 0:
                mask = wmask[ow] if mask is None else jnp.logical_and(mask, wmask[ow])
            plane = jnp.where(mask, plane, 0.0)
            acc0 = acc0 + w2v_ref[0, tap] * plane
            acc1 = acc1 + w2v_ref[1, tap] * plane
            # `plane` dies here -> no spill pressure.

    # Reduce over hidden channels (C contiguous (N, L) row blocks) -> (N, L).
    def ch_reduce(acc):
        a = acc[0:N]
        for c in range(1, C):
            a = a + acc[c * N:(c + 1) * N]
        return a

    att1 = jax.nn.sigmoid(ch_reduce(acc0) + p_ref[B2_OFF + 0])
    att2 = jax.nn.sigmoid(ch_reduce(acc1) + p_ref[B2_OFF + 1])

    # ---- Stage 3: gate both branches; sublane- and lane-dense full-slab stores.
    out1 = jnp.concatenate(
        [x1v[n * C:(n + 1) * C].astype(jnp.float32) * att1[n:n + 1] for n in range(N)],
        axis=0)
    out2 = jnp.concatenate(
        [x2v[n * C:(n + 1) * C].astype(jnp.float32) * att2[n:n + 1] for n in range(N)],
        axis=0)
    y1_ref[...] = out1.astype(y1_ref.dtype)
    y2_ref[...] = out2.astype(y2_ref.dtype)


def pack_rfam_params(params, batch):
    """Pack module parameters ONCE, outside the per-call hot path.

    Returns:
      smem_vec: f32[C*2C + C + C + 2]  -- w1, gamma, beta, b2 scalars (SMEM).
      w2vec:    f32[2, 9, C*batch, 1]  -- per-sublane Stage-2 weight vectors
                (row c*batch + n carries w2[co, c, kh, kw]) for VMEM.
    b1 is dropped: cancelled by training-mode BatchNorm mean subtraction.
    """
    w1, b1, gamma, beta, w2, b2 = params
    del b1
    C = w1.shape[0]
    smem_vec = jnp.concatenate([
        w1.reshape(-1).astype(jnp.float32),
        gamma.astype(jnp.float32),
        beta.astype(jnp.float32),
        b2.astype(jnp.float32),
    ])
    w2r = w2.reshape(2, C, 9).astype(jnp.float32)      # (co, c, tap)
    w2v = jnp.transpose(w2r, (0, 2, 1))                # (co, tap, c)
    w2v = jnp.repeat(w2v, batch, axis=2)[..., None]    # (co, tap, c*N + n, 1)
    return smem_vec, w2v


@jax.jit
def rfam_forward(x1, x2, smem_params, w2vec):
    N, C, H, W = x1.shape
    L = H * W
    # Free contiguous reshapes to the sublane+lane-dense (N*C, H*W) slab.
    x1s = x1.reshape(N * C, L)
    x2s = x2.reshape(N * C, L)

    vmem = pl.BlockSpec(memory_space=pltpu.MemorySpace.VMEM)
    smem = pl.BlockSpec(memory_space=pltpu.MemorySpace.SMEM)
    kernel = functools.partial(rfam_kernel, N=N, C=C, H=H, W=W)

    y1s, y2s = pl.pallas_call(
        kernel,
        out_shape=(jax.ShapeDtypeStruct((N * C, L), x1.dtype),
                   jax.ShapeDtypeStruct((N * C, L), x2.dtype)),
        in_specs=[vmem, vmem, vmem, smem],
        out_specs=(vmem, vmem),
    )(x1s, x2s, w2vec, smem_params)

    return y1s.reshape(N, C, H, W), y2s.reshape(N, C, H, W)


def rfam_reference(x1, x2, params):
    """Pure-JAX reference (training-mode BatchNorm, cross-correlation conv)."""
    w1, b1, gamma, beta, w2, b2 = params
    u = jnp.concatenate([x1, x2], axis=1)
    z = jnp.einsum('nchw,oc->nohw', u, w1) + b1[None, :, None, None]
    m = jnp.mean(z, axis=(0, 2, 3), keepdims=True)
    v = jnp.mean((z - m) ** 2, axis=(0, 2, 3), keepdims=True)
    y = jnp.maximum(gamma[None, :, None, None] * (z - m) / jnp.sqrt(v + BN_EPS)
                    + beta[None, :, None, None], 0.0)
    a = lax.conv_general_dilated(y, w2, (1, 1), 'SAME',
                                 dimension_numbers=('NCHW', 'OIHW', 'NCHW'))
    a = jax.nn.sigmoid(a + b2[None, :, None, None])
    return x1 * a[:, 0:1], x2 * a[:, 1:2]


if __name__ == "__main__":
    key = jax.random.PRNGKey(0)
    k1, k2, kw1, kb1, kw2, kb2 = jax.random.split(key, 6)
    N, C, H, W = 2, FEATURES, 16, 16

    x1 = jax.random.normal(k1, (N, C, H, W), jnp.float32)
    x2 = jax.random.normal(k2, (N, C, H, W), jnp.float32)

    # Deterministic parameter init (PyTorch-like scales; BN defaults gamma=1, beta=0).
    w1 = jax.random.normal(kw1, (C, 2 * C), jnp.float32) / jnp.sqrt(2.0 * C)     # Conv2d(2C, C, 1)
    b1 = 0.01 * jax.random.normal(kb1, (C,), jnp.float32)
    gamma = jnp.ones((C,), jnp.float32)
    beta = jnp.zeros((C,), jnp.float32)
    w2 = jax.random.normal(kw2, (2, C, 3, 3), jnp.float32) / jnp.sqrt(9.0 * C)   # Conv2d(C, 2, 3, pad=1)
    b2 = 0.01 * jax.random.normal(kb2, (2,), jnp.float32)
    params = (w1, b1, gamma, beta, w2, b2)

    # Pack parameters once, outside the per-call path (perf-review item).
    smem_params, w2vec = pack_rfam_params(params, N)

    y1, y2 = jax.block_until_ready(rfam_forward(x1, x2, smem_params, w2vec))
    r1, r2 = rfam_reference(x1, x2, params)
    assert jnp.allclose(y1, r1, rtol=1e-4, atol=2e-5), float(jnp.max(jnp.abs(y1 - r1)))
    assert jnp.allclose(y2, r2, rtol=1e-4, atol=2e-5), float(jnp.max(jnp.abs(y2 - r2)))
    print("KERNEL_OK")
</pallas_src>

<mosaic_0001>
module attributes {stable_mosaic.version = 11 : i64} {
  func.func @rfam_kernel(%arg0: memref<8x256xf32, #tpu.memory_space<vmem>>, %arg1: memref<8x256xf32, #tpu.memory_space<vmem>>, %arg2: memref<2x9x8x1xf32, #tpu.memory_space<vmem>>, %arg3: memref<42xf32, #tpu.memory_space<smem>>, %arg4: memref<8x256xf32, #tpu.memory_space<vmem>>, %arg5: memref<8x256xf32, #tpu.memory_space<vmem>>) attributes {dimension_semantics = [], scalar_prefetch = 0 : i64, scratch_operands = 0 : i64, tpu.core_type = #tpu.core_type<tc>} {
    %c0 = arith.constant 0 : index
    %c0_0 = arith.constant 0 : index
    %0 = vector.load %arg0[%c0, %c0_0] : memref<8x256xf32, #tpu.memory_space<vmem>>, vector<8x256xf32>
    %c0_1 = arith.constant 0 : index
    %c0_2 = arith.constant 0 : index
    %1 = vector.load %arg1[%c0_1, %c0_2] : memref<8x256xf32, #tpu.memory_space<vmem>>, vector<8x256xf32>
    %2 = vector.extract_strided_slice %0 {offsets = [0, 0], sizes = [1, 256], strides = [1, 1]} : vector<8x256xf32> to vector<1x256xf32>
    %3 = vector.extract_strided_slice %0 {offsets = [4, 0], sizes = [1, 256], strides = [1, 1]} : vector<8x256xf32> to vector<1x256xf32>
    %4 = tpu.concatenate %2, %3 in 0 : vector<1x256xf32>, vector<1x256xf32> -> vector<2x256xf32>
    %5 = vector.extract_strided_slice %0 {offsets = [1, 0], sizes = [1, 256], strides = [1, 1]} : vector<8x256xf32> to vector<1x256xf32>
    %6 = vector.extract_strided_slice %0 {offsets = [5, 0], sizes = [1, 256], strides = [1, 1]} : vector<8x256xf32> to vector<1x256xf32>
    %7 = tpu.concatenate %5, %6 in 0 : vector<1x256xf32>, vector<1x256xf32> -> vector<2x256xf32>
    %8 = vector.extract_strided_slice %0 {offsets = [2, 0], sizes = [1, 256], strides = [1, 1]} : vector<8x256xf32> to vector<1x256xf32>
    %9 = vector.extract_strided_slice %0 {offsets = [6, 0], sizes = [1, 256], strides = [1, 1]} : vector<8x256xf32> to vector<1x256xf32>
    %10 = tpu.concatenate %8, %9 in 0 : vector<1x256xf32>, vector<1x256xf32> -> vector<2x256xf32>
    %11 = vector.extract_strided_slice %0 {offsets = [3, 0], sizes = [1, 256], strides = [1, 1]} : vector<8x256xf32> to vector<1x256xf32>
    %12 = vector.extract_strided_slice %0 {offsets = [7, 0], sizes = [1, 256], strides = [1, 1]} : vector<8x256xf32> to vector<1x256xf32>
    %13 = tpu.concatenate %11, %12 in 0 : vector<1x256xf32>, vector<1x256xf32> -> vector<2x256xf32>
    %14 = vector.extract_strided_slice %1 {offsets = [0, 0], sizes = [1, 256], strides = [1, 1]} : vector<8x256xf32> to vector<1x256xf32>
    %15 = vector.extract_strided_slice %1 {offsets = [4, 0], sizes = [1, 256], strides = [1, 1]} : vector<8x256xf32> to vector<1x256xf32>
    %16 = tpu.concatenate %14, %15 in 0 : vector<1x256xf32>, vector<1x256xf32> -> vector<2x256xf32>
    %17 = vector.extract_strided_slice %1 {offsets = [1, 0], sizes = [1, 256], strides = [1, 1]} : vector<8x256xf32> to vector<1x256xf32>
    %18 = vector.extract_strided_slice %1 {offsets = [5, 0], sizes = [1, 256], strides = [1, 1]} : vector<8x256xf32> to vector<1x256xf32>
    %19 = tpu.concatenate %17, %18 in 0 : vector<1x256xf32>, vector<1x256xf32> -> vector<2x256xf32>
    %20 = vector.extract_strided_slice %1 {offsets = [2, 0], sizes = [1, 256], strides = [1, 1]} : vector<8x256xf32> to vector<1x256xf32>
    %21 = vector.extract_strided_slice %1 {offsets = [6, 0], sizes = [1, 256], strides = [1, 1]} : vector<8x256xf32> to vector<1x256xf32>
    %22 = tpu.concatenate %20, %21 in 0 : vector<1x256xf32>, vector<1x256xf32> -> vector<2x256xf32>
    %23 = vector.extract_strided_slice %1 {offsets = [3, 0], sizes = [1, 256], strides = [1, 1]} : vector<8x256xf32> to vector<1x256xf32>
    %24 = vector.extract_strided_slice %1 {offsets = [7, 0], sizes = [1, 256], strides = [1, 1]} : vector<8x256xf32> to vector<1x256xf32>
    %25 = tpu.concatenate %23, %24 in 0 : vector<1x256xf32>, vector<1x256xf32> -> vector<2x256xf32>
    %c0_3 = arith.constant 0 : index
    %26 = memref.load %arg3[%c0_3] : memref<42xf32, #tpu.memory_space<smem>>
    %27 = vector.broadcast %26 : f32 to vector<2x256xf32>
    %28 = arith.mulf %27, %4 : vector<2x256xf32>
    %c1 = arith.constant 1 : index
    %29 = memref.load %arg3[%c1] : memref<42xf32, #tpu.memory_space<smem>>
    %30 = vector.broadcast %29 : f32 to vector<2x256xf32>
    %31 = arith.mulf %30, %7 : vector<2x256xf32>
    %32 = arith.addf %28, %31 : vector<2x256xf32>
    %c2 = arith.constant 2 : index
    %33 = memref.load %arg3[%c2] : memref<42xf32, #tpu.memory_space<smem>>
    %34 = vector.broadcast %33 : f32 to vector<2x256xf32>
    %35 = arith.mulf %34, %10 : vector<2x256xf32>
    %36 = arith.addf %32, %35 : vector<2x256xf32>
    %c3 = arith.constant 3 : index
    %37 = memref.load %arg3[%c3] : memref<42xf32, #tpu.memory_space<smem>>
    %38 = vector.broadcast %37 : f32 to vector<2x256xf32>
    %39 = arith.mulf %38, %13 : vector<2x256xf32>
    %40 = arith.addf %36, %39 : vector<2x256xf32>
    %c4 = arith.constant 4 : index
    %41 = memref.load %arg3[%c4] : memref<42xf32, #tpu.memory_space<smem>>
    %42 = vector.broadcast %41 : f32 to vector<2x256xf32>
    %43 = arith.mulf %42, %16 : vector<2x256xf32>
    %44 = arith.addf %40, %43 : vector<2x256xf32>
    %c5 = arith.constant 5 : index
    %45 = memref.load %arg3[%c5] : memref<42xf32, #tpu.memory_space<smem>>
    %46 = vector.broadcast %45 : f32 to vector<2x256xf32>
    %47 = arith.mulf %46, %19 : vector<2x256xf32>
    %48 = arith.addf %44, %47 : vector<2x256xf32>
    %c6 = arith.constant 6 : index
    %49 = memref.load %arg3[%c6] : memref<42xf32, #tpu.memory_space<smem>>
    %50 = vector.broadcast %49 : f32 to vector<2x256xf32>
    %51 = arith.mulf %50, %22 : vector<2x256xf32>
    %52 = arith.addf %48, %51 : vector<2x256xf32>
    %c7 = arith.constant 7 : index
    %53 = memref.load %arg3[%c7] : memref<42xf32, #tpu.memory_space<smem>>
    %54 = vector.broadcast %53 : f32 to vector<2x256xf32>
    %55 = arith.mulf %54, %25 : vector<2x256xf32>
    %56 = arith.addf %52, %55 : vector<2x256xf32>
    %57 = vector.shape_cast %56 : vector<2x256xf32> to vector<1x2x256xf32>
    %cst = arith.constant dense<0.000000e+00> : vector<1xf32>
    %58 = vector.multi_reduction <add>, %57, %cst [1, 2] : vector<1x2x256xf32> to vector<1xf32>
    %59 = vector.shape_cast %58 : vector<1xf32> to vector<1x1x1xf32>
    %60 = vector.extract %59[0, 0, 0] : f32 from vector<1x1x1xf32>
    %cst_4 = arith.constant 0.001953125 : f32
    %61 = arith.mulf %60, %cst_4 : f32
    %62 = arith.mulf %56, %56 : vector<2x256xf32>
    %63 = vector.shape_cast %62 : vector<2x256xf32> to vector<1x2x256xf32>
    %cst_5 = arith.constant dense<0.000000e+00> : vector<1xf32>
    %64 = vector.multi_reduction <add>, %63, %cst_5 [1, 2] : vector<1x2x256xf32> to vector<1xf32>
    %65 = vector.shape_cast %64 : vector<1xf32> to vector<1x1x1xf32>
    %66 = vector.extract %65[0, 0, 0] : f32 from vector<1x1x1xf32>
    %cst_6 = arith.constant 0.001953125 : f32
    %67 = arith.mulf %66, %cst_6 : f32
    %68 = arith.mulf %61, %61 : f32
    %69 = arith.subf %67, %68 : f32
    %cst_7 = arith.constant 0.000000e+00 : f32
    %70 = arith.maximumf %69, %cst_7 : f32
    %c32 = arith.constant 32 : index
    %71 = memref.load %arg3[%c32] : memref<42xf32, #tpu.memory_space<smem>>
    %cst_8 = arith.constant 9.99999974E-6 : f32
    %72 = arith.addf %70, %cst_8 : f32
    %73 = math.rsqrt %72 : f32
    %74 = arith.mulf %71, %73 : f32
    %c36 = arith.constant 36 : index
    %75 = memref.load %arg3[%c36] : memref<42xf32, #tpu.memory_space<smem>>
    %76 = arith.mulf %61, %74 : f32
    %77 = arith.subf %75, %76 : f32
    %78 = vector.broadcast %74 : f32 to vector<2x256xf32>
    %79 = arith.mulf %56, %78 : vector<2x256xf32>
    %80 = vector.broadcast %77 : f32 to vector<2x256xf32>
    %81 = arith.addf %79, %80 : vector<2x256xf32>
    %cst_9 = arith.constant 0.000000e+00 : f32
    %82 = vector.broadcast %cst_9 : f32 to vector<2x256xf32>
    %83 = arith.maximumf %81, %82 : vector<2x256xf32>
    %c8 = arith.constant 8 : index
    %84 = memref.load %arg3[%c8] : memref<42xf32, #tpu.memory_space<smem>>
    %85 = vector.broadcast %84 : f32 to vector<2x256xf32>
    %86 = arith.mulf %85, %4 : vector<2x256xf32>
    %c9 = arith.constant 9 : index
    %87 = memref.load %arg3[%c9] : memref<42xf32, #tpu.memory_space<smem>>
    %88 = vector.broadcast %87 : f32 to vector<2x256xf32>
    %89 = arith.mulf %88, %7 : vector<2x256xf32>
    %90 = arith.addf %86, %89 : vector<2x256xf32>
    %c10 = arith.constant 10 : index
    %91 = memref.load %arg3[%c10] : memref<42xf32, #tpu.memory_space<smem>>
    %92 = vector.broadcast %91 : f32 to vector<2x256xf32>
    %93 = arith.mulf %92, %10 : vector<2x256xf32>
    %94 = arith.addf %90, %93 : vector<2x256xf32>
    %c11 = arith.constant 11 : index
    %95 = memref.load %arg3[%c11] : memref<42xf32, #tpu.memory_space<smem>>
    %96 = vector.broadcast %95 : f32 to vector<2x256xf32>
    %97 = arith.mulf %96, %13 : vector<2x256xf32>
    %98 = arith.addf %94, %97 : vector<2x256xf32>
    %c12 = arith.constant 12 : index
    %99 = memref.load %arg3[%c12] : memref<42xf32, #tpu.memory_space<smem>>
    %100 = vector.broadcast %99 : f32 to vector<2x256xf32>
    %101 = arith.mulf %100, %16 : vector<2x256xf32>
    %102 = arith.addf %98, %101 : vector<2x256xf32>
    %c13 = arith.constant 13 : index
    %103 = memref.load %arg3[%c13] : memref<42xf32, #tpu.memory_space<smem>>
    %104 = vector.broadcast %103 : f32 to vector<2x256xf32>
    %105 = arith.mulf %104, %19 : vector<2x256xf32>
    %106 = arith.addf %102, %105 : vector<2x256xf32>
    %c14 = arith.constant 14 : index
    %107 = memref.load %arg3[%c14] : memref<42xf32, #tpu.memory_space<smem>>
    %108 = vector.broadcast %107 : f32 to vector<2x256xf32>
    %109 = arith.mulf %108, %22 : vector<2x256xf32>
    %110 = arith.addf %106, %109 : vector<2x256xf32>
    %c15 = arith.constant 15 : index
    %111 = memref.load %arg3[%c15] : memref<42xf32, #tpu.memory_space<smem>>
    %112 = vector.broadcast %111 : f32 to vector<2x256xf32>
    %113 = arith.mulf %112, %25 : vector<2x256xf32>
    %114 = arith.addf %110, %113 : vector<2x256xf32>
    %115 = vector.shape_cast %114 : vector<2x256xf32> to vector<1x2x256xf32>
    %cst_10 = arith.constant dense<0.000000e+00> : vector<1xf32>
    %116 = vector.multi_reduction <add>, %115, %cst_10 [1, 2] : vector<1x2x256xf32> to vector<1xf32>
    %117 = vector.shape_cast %116 : vector<1xf32> to vector<1x1x1xf32>
    %118 = vector.extract %117[0, 0, 0] : f32 from vector<1x1x1xf32>
    %cst_11 = arith.constant 0.001953125 : f32
    %119 = arith.mulf %118, %cst_11 : f32
    %120 = arith.mulf %114, %114 : vector<2x256xf32>
    %121 = vector.shape_cast %120 : vector<2x256xf32> to vector<1x2x256xf32>
    %cst_12 = arith.constant dense<0.000000e+00> : vector<1xf32>
    %122 = vector.multi_reduction <add>, %121, %cst_12 [1, 2] : vector<1x2x256xf32> to vector<1xf32>
    %123 = vector.shape_cast %122 : vector<1xf32> to vector<1x1x1xf32>
    %124 = vector.extract %123[0, 0, 0] : f32 from vector<1x1x1xf32>
    %cst_13 = arith.constant 0.001953125 : f32
    %125 = arith.mulf %124, %cst_13 : f32
    %126 = arith.mulf %119, %119 : f32
    %127 = arith.subf %125, %126 : f32
    %cst_14 = arith.constant 0.000000e+00 : f32
    %128 = arith.maximumf %127, %cst_14 : f32
    %c33 = arith.constant 33 : index
    %129 = memref.load %arg3[%c33] : memref<42xf32, #tpu.memory_space<smem>>
    %cst_15 = arith.constant 9.99999974E-6 : f32
    %130 = arith.addf %128, %cst_15 : f32
    %131 = math.rsqrt %130 : f32
    %132 = arith.mulf %129, %131 : f32
    %c37 = arith.constant 37 : index
    %133 = memref.load %arg3[%c37] : memref<42xf32, #tpu.memory_space<smem>>
    %134 = arith.mulf %119, %132 : f32
    %135 = arith.subf %133, %134 : f32
    %136 = vector.broadcast %132 : f32 to vector<2x256xf32>
    %137 = arith.mulf %114, %136 : vector<2x256xf32>
    %138 = vector.broadcast %135 : f32 to vector<2x256xf32>
    %139 = arith.addf %137, %138 : vector<2x256xf32>
    %cst_16 = arith.constant 0.000000e+00 : f32
    %140 = vector.broadcast %cst_16 : f32 to vector<2x256xf32>
    %141 = arith.maximumf %139, %140 : vector<2x256xf32>
    %c16 = arith.constant 16 : index
    %142 = memref.load %arg3[%c16] : memref<42xf32, #tpu.memory_space<smem>>
    %143 = vector.broadcast %142 : f32 to vector<2x256xf32>
    %144 = arith.mulf %143, %4 : vector<2x256xf32>
    %c17 = arith.constant 17 : index
    %145 = memref.load %arg3[%c17] : memref<42xf32, #tpu.memory_space<smem>>
    %146 = vector.broadcast %145 : f32 to vector<2x256xf32>
    %147 = arith.mulf %146, %7 : vector<2x256xf32>
    %148 = arith.addf %144, %147 : vector<2x256xf32>
    %c18 = arith.constant 18 : index
    %149 = memref.load %arg3[%c18] : memref<42xf32, #tpu.memory_space<smem>>
    %150 = vector.broadcast %149 : f32 to vector<2x256xf32>
    %151 = arith.mulf %150, %10 : vector<2x256xf32>
    %152 = arith.addf %148, %151 : vector<2x256xf32>
    %c19 = arith.constant 19 : index
    %153 = memref.load %arg3[%c19] : memref<42xf32, #tpu.memory_space<smem>>
    %154 = vector.broadcast %153 : f32 to vector<2x256xf32>
    %155 = arith.mulf %154, %13 : vector<2x256xf32>
    %156 = arith.addf %152, %155 : vector<2x256xf32>
    %c20 = arith.constant 20 : index
    %157 = memref.load %arg3[%c20] : memref<42xf32, #tpu.memory_space<smem>>
    %158 = vector.broadcast %157 : f32 to vector<2x256xf32>
    %159 = arith.mulf %158, %16 : vector<2x256xf32>
    %160 = arith.addf %156, %159 : vector<2x256xf32>
    %c21 = arith.constant 21 : index
    %161 = memref.load %arg3[%c21] : memref<42xf32, #tpu.memory_space<smem>>
    %162 = vector.broadcast %161 : f32 to vector<2x256xf32>
    %163 = arith.mulf %162, %19 : vector<2x256xf32>
    %164 = arith.addf %160, %163 : vector<2x256xf32>
    %c22 = arith.constant 22 : index
    %165 = memref.load %arg3[%c22] : memref<42xf32, #tpu.memory_space<smem>>
    %166 = vector.broadcast %165 : f32 to vector<2x256xf32>
    %167 = arith.mulf %166, %22 : vector<2x256xf32>
    %168 = arith.addf %164, %167 : vector<2x256xf32>
    %c23 = arith.constant 23 : index
    %169 = memref.load %arg3[%c23] : memref<42xf32, #tpu.memory_space<smem>>
    %170 = vector.broadcast %169 : f32 to vector<2x256xf32>
    %171 = arith.mulf %170, %25 : vector<2x256xf32>
    %172 = arith.addf %168, %171 : vector<2x256xf32>
    %173 = vector.shape_cast %172 : vector<2x256xf32> to vector<1x2x256xf32>
    %cst_17 = arith.constant dense<0.000000e+00> : vector<1xf32>
    %174 = vector.multi_reduction <add>, %173, %cst_17 [1, 2] : vector<1x2x256xf32> to vector<1xf32>
    %175 = vector.shape_cast %174 : vector<1xf32> to vector<1x1x1xf32>
    %176 = vector.extract %175[0, 0, 0] : f32 from vector<1x1x1xf32>
    %cst_18 = arith.constant 0.001953125 : f32
    %177 = arith.mulf %176, %cst_18 : f32
    %178 = arith.mulf %172, %172 : vector<2x256xf32>
    %179 = vector.shape_cast %178 : vector<2x256xf32> to vector<1x2x256xf32>
    %cst_19 = arith.constant dense<0.000000e+00> : vector<1xf32>
    %180 = vector.multi_reduction <add>, %179, %cst_19 [1, 2] : vector<1x2x256xf32> to vector<1xf32>
    %181 = vector.shape_cast %180 : vector<1xf32> to vector<1x1x1xf32>
    %182 = vector.extract %181[0, 0, 0] : f32 from vector<1x1x1xf32>
    %cst_20 = arith.constant 0.001953125 : f32
    %183 = arith.mulf %182, %cst_20 : f32
    %184 = arith.mulf %177, %177 : f32
    %185 = arith.subf %183, %184 : f32
    %cst_21 = arith.constant 0.000000e+00 : f32
    %186 = arith.maximumf %185, %cst_21 : f32
    %c34 = arith.constant 34 : index
    %187 = memref.load %arg3[%c34] : memref<42xf32, #tpu.memory_space<smem>>
    %cst_22 = arith.constant 9.99999974E-6 : f32
    %188 = arith.addf %186, %cst_22 : f32
    %189 = math.rsqrt %188 : f32
    %190 = arith.mulf %187, %189 : f32
    %c38 = arith.constant 38 : index
    %191 = memref.load %arg3[%c38] : memref<42xf32, #tpu.memory_space<smem>>
    %192 = arith.mulf %177, %190 : f32
    %193 = arith.subf %191, %192 : f32
    %194 = vector.broadcast %190 : f32 to vector<2x256xf32>
    %195 = arith.mulf %172, %194 : vector<2x256xf32>
    %196 = vector.broadcast %193 : f32 to vector<2x256xf32>
    %197 = arith.addf %195, %196 : vector<2x256xf32>
    %cst_23 = arith.constant 0.000000e+00 : f32
    %198 = vector.broadcast %cst_23 : f32 to vector<2x256xf32>
    %199 = arith.maximumf %197, %198 : vector<2x256xf32>
    %c24 = arith.constant 24 : index
    %200 = memref.load %arg3[%c24] : memref<42xf32, #tpu.memory_space<smem>>
    %201 = vector.broadcast %200 : f32 to vector<2x256xf32>
    %202 = arith.mulf %201, %4 : vector<2x256xf32>
    %c25 = arith.constant 25 : index
    %203 = memref.load %arg3[%c25] : memref<42xf32, #tpu.memory_space<smem>>
    %204 = vector.broadcast %203 : f32 to vector<2x256xf32>
    %205 = arith.mulf %204, %7 : vector<2x256xf32>
    %206 = arith.addf %202, %205 : vector<2x256xf32>
    %c26 = arith.constant 26 : index
    %207 = memref.load %arg3[%c26] : memref<42xf32, #tpu.memory_space<smem>>
    %208 = vector.broadcast %207 : f32 to vector<2x256xf32>
    %209 = arith.mulf %208, %10 : vector<2x256xf32>
    %210 = arith.addf %206, %209 : vector<2x256xf32>
    %c27 = arith.constant 27 : index
    %211 = memref.load %arg3[%c27] : memref<42xf32, #tpu.memory_space<smem>>
    %212 = vector.broadcast %211 : f32 to vector<2x256xf32>
    %213 = arith.mulf %212, %13 : vector<2x256xf32>
    %214 = arith.addf %210, %213 : vector<2x256xf32>
    %c28 = arith.constant 28 : index
    %215 = memref.load %arg3[%c28] : memref<42xf32, #tpu.memory_space<smem>>
    %216 = vector.broadcast %215 : f32 to vector<2x256xf32>
    %217 = arith.mulf %216, %16 : vector<2x256xf32>
    %218 = arith.addf %214, %217 : vector<2x256xf32>
    %c29 = arith.constant 29 : index
    %219 = memref.load %arg3[%c29] : memref<42xf32, #tpu.memory_space<smem>>
    %220 = vector.broadcast %219 : f32 to vector<2x256xf32>
    %221 = arith.mulf %220, %19 : vector<2x256xf32>
    %222 = arith.addf %218, %221 : vector<2x256xf32>
    %c30 = arith.constant 30 : index
    %223 = memref.load %arg3[%c30] : memref<42xf32, #tpu.memory_space<smem>>
    %224 = vector.broadcast %223 : f32 to vector<2x256xf32>
    %225 = arith.mulf %224, %22 : vector<2x256xf32>
    %226 = arith.addf %222, %225 : vector<2x256xf32>
    %c31 = arith.constant 31 : index
    %227 = memref.load %arg3[%c31] : memref<42xf32, #tpu.memory_space<smem>>
    %228 = vector.broadcast %227 : f32 to vector<2x256xf32>
    %229 = arith.mulf %228, %25 : vector<2x256xf32>
    %230 = arith.addf %226, %229 : vector<2x256xf32>
    %231 = vector.shape_cast %230 : vector<2x256xf32> to vector<1x2x256xf32>
    %cst_24 = arith.constant dense<0.000000e+00> : vector<1xf32>
    %232 = vector.multi_reduction <add>, %231, %cst_24 [1, 2] : vector<1x2x256xf32> to vector<1xf32>
    %233 = vector.shape_cast %232 : vector<1xf32> to vector<1x1x1xf32>
    %234 = vector.extract %233[0, 0, 0] : f32 from vector<1x1x1xf32>
    %cst_25 = arith.constant 0.001953125 : f32
    %235 = arith.mulf %234, %cst_25 : f32
    %236 = arith.mulf %230, %230 : vector<2x256xf32>
    %237 = vector.shape_cast %236 : vector<2x256xf32> to vector<1x2x256xf32>
    %cst_26 = arith.constant dense<0.000000e+00> : vector<1xf32>
    %238 = vector.multi_reduction <add>, %237, %cst_26 [1, 2] : vector<1x2x256xf32> to vector<1xf32>
    %239 = vector.shape_cast %238 : vector<1xf32> to vector<1x1x1xf32>
    %240 = vector.extract %239[0, 0, 0] : f32 from vector<1x1x1xf32>
    %cst_27 = arith.constant 0.001953125 : f32
    %241 = arith.mulf %240, %cst_27 : f32
    %242 = arith.mulf %235, %235 : f32
    %243 = arith.subf %241, %242 : f32
    %cst_28 = arith.constant 0.000000e+00 : f32
    %244 = arith.maximumf %243, %cst_28 : f32
    %c35 = arith.constant 35 : index
    %245 = memref.load %arg3[%c35] : memref<42xf32, #tpu.memory_space<smem>>
    %cst_29 = arith.constant 9.99999974E-6 : f32
    %246 = arith.addf %244, %cst_29 : f32
    %247 = math.rsqrt %246 : f32
    %248 = arith.mulf %245, %247 : f32
    %c39 = arith.constant 39 : index
    %249 = memref.load %arg3[%c39] : memref<42xf32, #tpu.memory_space<smem>>
    %250 = arith.mulf %235, %248 : f32
    %251 = arith.subf %249, %250 : f32
    %252 = vector.broadcast %248 : f32 to vector<2x256xf32>
    %253 = arith.mulf %230, %252 : vector<2x256xf32>
    %254 = vector.broadcast %251 : f32 to vector<2x256xf32>
    %255 = arith.addf %253, %254 : vector<2x256xf32>
    %cst_30 = arith.constant 0.000000e+00 : f32
    %256 = vector.broadcast %cst_30 : f32 to vector<2x256xf32>
    %257 = arith.maximumf %255, %256 : vector<2x256xf32>
    %258 = tpu.concatenate %83, %141, %199, %257 in 0 : vector<2x256xf32>, vector<2x256xf32>, vector<2x256xf32>, vector<2x256xf32> -> vector<8x256xf32>
    %259 = tpu.iota {dimensions = array<i32: 1>} : vector<8x256xi32>
    %c15_i32 = arith.constant 15 : i32
    %260 = vector.broadcast %c15_i32 : i32 to vector<8x256xi32>
    %261 = arith.andi %259, %260 : vector<8x256xi32>
    %c16_i32 = arith.constant 16 : i32
    %262 = vector.broadcast %c16_i32 : i32 to vector<8x256xi32>
    %263 = arith.cmpi sge, %259, %262 : vector<8x256xi32>
    %c240_i32 = arith.constant 240 : i32
    %264 = vector.broadcast %c240_i32 : i32 to vector<8x256xi32>
    %265 = arith.cmpi slt, %259, %264 : vector<8x256xi32>
    %c1_i32 = arith.constant 1 : i32
    %266 = vector.broadcast %c1_i32 : i32 to vector<8x256xi32>
    %267 = arith.cmpi sge, %261, %266 : vector<8x256xi32>
    %c14_i32 = arith.constant 14 : i32
    %268 = vector.broadcast %c14_i32 : i32 to vector<8x256xi32>
    %269 = arith.cmpi sle, %261, %268 : vector<8x256xi32>
    %c0_31 = arith.constant 0 : index
    %c4_32 = arith.constant 4 : index
    %c0_33 = arith.constant 0 : index
    %c0_34 = arith.constant 0 : index
    %270 = vector.load %arg2[%c0_31, %c4_32, %c0_33, %c0_34] : memref<2x9x8x1xf32, #tpu.memory_space<vmem>>, vector<1x1x8x1xf32>
    %271 = vector.shape_cast %270 : vector<1x1x8x1xf32> to vector<8x1xf32>
    %272 = vector.broadcast %271 : vector<8x1xf32> to vector<8x256xf32>
    %273 = arith.mulf %272, %258 : vector<8x256xf32>
    %c1_35 = arith.constant 1 : index
    %c4_36 = arith.constant 4 : index
    %c0_37 = arith.constant 0 : index
    %c0_38 = arith.constant 0 : index
    %274 = vector.load %arg2[%c1_35, %c4_36, %c0_37, %c0_38] : memref<2x9x8x1xf32, #tpu.memory_space<vmem>>, vector<1x1x8x1xf32>
    %275 = vector.shape_cast %274 : vector<1x1x8x1xf32> to vector<8x1xf32>
    %276 = vector.broadcast %275 : vector<8x1xf32> to vector<8x256xf32>
    %277 = arith.mulf %276, %258 : vector<8x256xf32>
    %c17_i32 = arith.constant 17 : i32
    %278 = tpu.dynamic_rotate %258 by %c17_i32 dim 1 : vector<8x256xf32>, i32 -> vector<8x256xf32>
    %279 = arith.andi %263, %267 : vector<8x256xi1>
    %cst_39 = arith.constant 0.000000e+00 : f32
    %280 = vector.broadcast %cst_39 : f32 to vector<8x256xf32>
    %281 = arith.select %279, %278, %280 : vector<8x256xi1>, vector<8x256xf32>
    %c0_40 = arith.constant 0 : index
    %c0_41 = arith.constant 0 : index
    %c0_42 = arith.constant 0 : index
    %c0_43 = arith.constant 0 : index
    %282 = vector.load %arg2[%c0_40, %c0_41, %c0_42, %c0_43] : memref<2x9x8x1xf32, #tpu.memory_space<vmem>>, vector<1x1x8x1xf32>
    %283 = vector.shape_cast %282 : vector<1x1x8x1xf32> to vector<8x1xf32>
    %284 = vector.broadcast %283 : vector<8x1xf32> to vector<8x256xf32>
    %285 = arith.mulf %284, %281 : vector<8x256xf32>
    %286 = arith.addf %273, %285 : vector<8x256xf32>
    %c1_44 = arith.constant 1 : index
    %c0_45 = arith.constant 0 : index
    %c0_46 = arith.constant 0 : index
    %c0_47 = arith.constant 0 : index
    %287 = vector.load %arg2[%c1_44, %c0_45, %c0_46, %c0_47] : memref<2x9x8x1xf32, #tpu.memory_space<vmem>>, vector<1x1x8x1xf32>
    %288 = vector.shape_cast %287 : vector<1x1x8x1xf32> to vector<8x1xf32>
    %289 = vector.broadcast %288 : vector<8x1xf32> to vector<8x256xf32>
    %290 = arith.mulf %289, %281 : vector<8x256xf32>
    %291 = arith.addf %277, %290 : vector<8x256xf32>
    %c16_i32_48 = arith.constant 16 : i32
    %292 = tpu.dynamic_rotate %258 by %c16_i32_48 dim 1 : vector<8x256xf32>, i32 -> vector<8x256xf32>
    %cst_49 = arith.constant 0.000000e+00 : f32
    %293 = vector.broadcast %cst_49 : f32 to vector<8x256xf32>
    %294 = arith.select %263, %292, %293 : vector<8x256xi1>, vector<8x256xf32>
    %c0_50 = arith.constant 0 : index
    %c1_51 = arith.constant 1 : index
    %c0_52 = arith.constant 0 : index
    %c0_53 = arith.constant 0 : index
    %295 = vector.load %arg2[%c0_50, %c1_51, %c0_52, %c0_53] : memref<2x9x8x1xf32, #tpu.memory_space<vmem>>, vector<1x1x8x1xf32>
    %296 = vector.shape_cast %295 : vector<1x1x8x1xf32> to vector<8x1xf32>
    %297 = vector.broadcast %296 : vector<8x1xf32> to vector<8x256xf32>
    %298 = arith.mulf %297, %294 : vector<8x256xf32>
    %299 = arith.addf %286, %298 : vector<8x256xf32>
    %c1_54 = arith.constant 1 : index
    %c1_55 = arith.constant 1 : index
    %c0_56 = arith.constant 0 : index
    %c0_57 = arith.constant 0 : index
    %300 = vector.load %arg2[%c1_54, %c1_55, %c0_56, %c0_57] : memref<2x9x8x1xf32, #tpu.memory_space<vmem>>, vector<1x1x8x1xf32>
    %301 = vector.shape_cast %300 : vector<1x1x8x1xf32> to vector<8x1xf32>
    %302 = vector.broadcast %301 : vector<8x1xf32> to vector<8x256xf32>
    %303 = arith.mulf %302, %294 : vector<8x256xf32>
    %304 = arith.addf %291, %303 : vector<8x256xf32>
    %c15_i32_58 = arith.constant 15 : i32
    %305 = tpu.dynamic_rotate %258 by %c15_i32_58 dim 1 : vector<8x256xf32>, i32 -> vector<8x256xf32>
    %306 = arith.andi %263, %269 : vector<8x256xi1>
    %cst_59 = arith.constant 0.000000e+00 : f32
    %307 = vector.broadcast %cst_59 : f32 to vector<8x256xf32>
    %308 = arith.select %306, %305, %307 : vector<8x256xi1>, vector<8x256xf32>
    %c0_60 = arith.constant 0 : index
    %c2_61 = arith.constant 2 : index
    %c0_62 = arith.constant 0 : index
    %c0_63 = arith.constant 0 : index
    %309 = vector.load %arg2[%c0_60, %c2_61, %c0_62, %c0_63] : memref<2x9x8x1xf32, #tpu.memory_space<vmem>>, vector<1x1x8x1xf32>
    %310 = vector.shape_cast %309 : vector<1x1x8x1xf32> to vector<8x1xf32>
    %311 = vector.broadcast %310 : vector<8x1xf32> to vector<8x256xf32>
    %312 = arith.mulf %311, %308 : vector<8x256xf32>
    %313 = arith.addf %299, %312 : vector<8x256xf32>
    %c1_64 = arith.constant 1 : index
    %c2_65 = arith.constant 2 : index
    %c0_66 = arith.constant 0 : index
    %c0_67 = arith.constant 0 : index
    %314 = vector.load %arg2[%c1_64, %c2_65, %c0_66, %c0_67] : memref<2x9x8x1xf32, #tpu.memory_space<vmem>>, vector<1x1x8x1xf32>
    %315 = vector.shape_cast %314 : vector<1x1x8x1xf32> to vector<8x1xf32>
    %316 = vector.broadcast %315 : vector<8x1xf32> to vector<8x256xf32>
    %317 = arith.mulf %316, %308 : vector<8x256xf32>
    %318 = arith.addf %304, %317 : vector<8x256xf32>
    %c1_i32_68 = arith.constant 1 : i32
    %319 = tpu.dynamic_rotate %258 by %c1_i32_68 dim 1 : vector<8x256xf32>, i32 -> vector<8x256xf32>
    %cst_69 = arith.constant 0.000000e+00 : f32
    %320 = vector.broadcast %cst_69 : f32 to vector<8x256xf32>
    %321 = arith.select %267, %319, %320 : vector<8x256xi1>, vector<8x256xf32>
    %c0_70 = arith.constant 0 : index
    %c3_71 = arith.constant 3 : index
    %c0_72 = arith.constant 0 : index
    %c0_73 = arith.constant 0 : index
    %322 = vector.load %arg2[%c0_70, %c3_71, %c0_72, %c0_73] : memref<2x9x8x1xf32, #tpu.memory_space<vmem>>, vector<1x1x8x1xf32>
    %323 = vector.shape_cast %322 : vector<1x1x8x1xf32> to vector<8x1xf32>
    %324 = vector.broadcast %323 : vector<8x1xf32> to vector<8x256xf32>
    %325 = arith.mulf %324, %321 : vector<8x256xf32>
    %326 = arith.addf %313, %325 : vector<8x256xf32>
    %c1_74 = arith.constant 1 : index
    %c3_75 = arith.constant 3 : index
    %c0_76 = arith.constant 0 : index
    %c0_77 = arith.constant 0 : index
    %327 = vector.load %arg2[%c1_74, %c3_75, %c0_76, %c0_77] : memref<2x9x8x1xf32, #tpu.memory_space<vmem>>, vector<1x1x8x1xf32>
    %328 = vector.shape_cast %327 : vector<1x1x8x1xf32> to vector<8x1xf32>
    %329 = vector.broadcast %328 : vector<8x1xf32> to vector<8x256xf32>
    %330 = arith.mulf %329, %321 : vector<8x256xf32>
    %331 = arith.addf %318, %330 : vector<8x256xf32>
    %c255_i32 = arith.constant 255 : i32
    %332 = tpu.dynamic_rotate %258 by %c255_i32 dim 1 : vector<8x256xf32>, i32 -> vector<8x256xf32>
    %cst_78 = arith.constant 0.000000e+00 : f32
    %333 = vector.broadcast %cst_78 : f32 to vector<8x256xf32>
    %334 = arith.select %269, %332, %333 : vector<8x256xi1>, vector<8x256xf32>
    %c0_79 = arith.constant 0 : index
    %c5_80 = arith.constant 5 : index
    %c0_81 = arith.constant 0 : index
    %c0_82 = arith.constant 0 : index
    %335 = vector.load %arg2[%c0_79, %c5_80, %c0_81, %c0_82] : memref<2x9x8x1xf32, #tpu.memory_space<vmem>>, vector<1x1x8x1xf32>
    %336 = vector.shape_cast %335 : vector<1x1x8x1xf32> to vector<8x1xf32>
    %337 = vector.broadcast %336 : vector<8x1xf32> to vector<8x256xf32>
    %338 = arith.mulf %337, %334 : vector<8x256xf32>
    %339 = arith.addf %326, %338 : vector<8x256xf32>
    %c1_83 = arith.constant 1 : index
    %c5_84 = arith.constant 5 : index
    %c0_85 = arith.constant 0 : index
    %c0_86 = arith.constant 0 : index
    %340 = vector.load %arg2[%c1_83, %c5_84, %c0_85, %c0_86] : memref<2x9x8x1xf32, #tpu.memory_space<vmem>>, vector<1x1x8x1xf32>
    %341 = vector.shape_cast %340 : vector<1x1x8x1xf32> to vector<8x1xf32>
    %342 = vector.broadcast %341 : vector<8x1xf32> to vector<8x256xf32>
    %343 = arith.mulf %342, %334 : vector<8x256xf32>
    %344 = arith.addf %331, %343 : vector<8x256xf32>
    %c241_i32 = arith.constant 241 : i32
    %345 = tpu.dynamic_rotate %258 by %c241_i32 dim 1 : vector<8x256xf32>, i32 -> vector<8x256xf32>
    %346 = arith.andi %265, %267 : vector<8x256xi1>
    %cst_87 = arith.constant 0.000000e+00 : f32
    %347 = vector.broadcast %cst_87 : f32 to vector<8x256xf32>
    %348 = arith.select %346, %345, %347 : vector<8x256xi1>, vector<8x256xf32>
    %c0_88 = arith.constant 0 : index
    %c6_89 = arith.constant 6 : index
    %c0_90 = arith.constant 0 : index
    %c0_91 = arith.constant 0 : index
    %349 = vector.load %arg2[%c0_88, %c6_89, %c0_90, %c0_91] : memref<2x9x8x1xf32, #tpu.memory_space<vmem>>, vector<1x1x8x1xf32>
    %350 = vector.shape_cast %349 : vector<1x1x8x1xf32> to vector<8x1xf32>
    %351 = vector.broadcast %350 : vector<8x1xf32> to vector<8x256xf32>
    %352 = arith.mulf %351, %348 : vector<8x256xf32>
    %353 = arith.addf %339, %352 : vector<8x256xf32>
    %c1_92 = arith.constant 1 : index
    %c6_93 = arith.constant 6 : index
    %c0_94 = arith.constant 0 : index
    %c0_95 = arith.constant 0 : index
    %354 = vector.load %arg2[%c1_92, %c6_93, %c0_94, %c0_95] : memref<2x9x8x1xf32, #tpu.memory_space<vmem>>, vector<1x1x8x1xf32>
    %355 = vector.shape_cast %354 : vector<1x1x8x1xf32> to vector<8x1xf32>
    %356 = vector.broadcast %355 : vector<8x1xf32> to vector<8x256xf32>
    %357 = arith.mulf %356, %348 : vector<8x256xf32>
    %358 = arith.addf %344, %357 : vector<8x256xf32>
    %c240_i32_96 = arith.constant 240 : i32
    %359 = tpu.dynamic_rotate %258 by %c240_i32_96 dim 1 : vector<8x256xf32>, i32 -> vector<8x256xf32>
    %cst_97 = arith.constant 0.000000e+00 : f32
    %360 = vector.broadcast %cst_97 : f32 to vector<8x256xf32>
    %361 = arith.select %265, %359, %360 : vector<8x256xi1>, vector<8x256xf32>
    %c0_98 = arith.constant 0 : index
    %c7_99 = arith.constant 7 : index
    %c0_100 = arith.constant 0 : index
    %c0_101 = arith.constant 0 : index
    %362 = vector.load %arg2[%c0_98, %c7_99, %c0_100, %c0_101] : memref<2x9x8x1xf32, #tpu.memory_space<vmem>>, vector<1x1x8x1xf32>
    %363 = vector.shape_cast %362 : vector<1x1x8x1xf32> to vector<8x1xf32>
    %364 = vector.broadcast %363 : vector<8x1xf32> to vector<8x256xf32>
    %365 = arith.mulf %364, %361 : vector<8x256xf32>
    %366 = arith.addf %353, %365 : vector<8x256xf32>
    %c1_102 = arith.constant 1 : index
    %c7_103 = arith.constant 7 : index
    %c0_104 = arith.constant 0 : index
    %c0_105 = arith.constant 0 : index
    %367 = vector.load %arg2[%c1_102, %c7_103, %c0_104, %c0_105] : memref<2x9x8x1xf32, #tpu.memory_space<vmem>>, vector<1x1x8x1xf32>
    %368 = vector.shape_cast %367 : vector<1x1x8x1xf32> to vector<8x1xf32>
    %369 = vector.broadcast %368 : vector<8x1xf32> to vector<8x256xf32>
    %370 = arith.mulf %369, %361 : vector<8x256xf32>
    %371 = arith.addf %358, %370 : vector<8x256xf32>
    %c239_i32 = arith.constant 239 : i32
    %372 = tpu.dynamic_rotate %258 by %c239_i32 dim 1 : vector<8x256xf32>, i32 -> vector<8x256xf32>
    %373 = arith.andi %265, %269 : vector<8x256xi1>
    %cst_106 = arith.constant 0.000000e+00 : f32
    %374 = vector.broadcast %cst_106 : f32 to vector<8x256xf32>
    %375 = arith.select %373, %372, %374 : vector<8x256xi1>, vector<8x256xf32>
    %c0_107 = arith.constant 0 : index
    %c8_108 = arith.constant 8 : index
    %c0_109 = arith.constant 0 : index
    %c0_110 = arith.constant 0 : index
    %376 = vector.load %arg2[%c0_107, %c8_108, %c0_109, %c0_110] : memref<2x9x8x1xf32, #tpu.memory_space<vmem>>, vector<1x1x8x1xf32>
    %377 = vector.shape_cast %376 : vector<1x1x8x1xf32> to vector<8x1xf32>
    %378 = vector.broadcast %377 : vector<8x1xf32> to vector<8x256xf32>
    %379 = arith.mulf %378, %375 : vector<8x256xf32>
    %380 = arith.addf %366, %379 : vector<8x256xf32>
    %c1_111 = arith.constant 1 : index
    %c8_112 = arith.constant 8 : index
    %c0_113 = arith.constant 0 : index
    %c0_114 = arith.constant 0 : index
    %381 = vector.load %arg2[%c1_111, %c8_112, %c0_113, %c0_114] : memref<2x9x8x1xf32, #tpu.memory_space<vmem>>, vector<1x1x8x1xf32>
    %382 = vector.shape_cast %381 : vector<1x1x8x1xf32> to vector<8x1xf32>
    %383 = vector.broadcast %382 : vector<8x1xf32> to vector<8x256xf32>
    %384 = arith.mulf %383, %375 : vector<8x256xf32>
    %385 = arith.addf %371, %384 : vector<8x256xf32>
    %386 = vector.extract_strided_slice %380 {offsets = [0, 0], sizes = [2, 256], strides = [1, 1]} : vector<8x256xf32> to vector<2x256xf32>
    %387 = vector.extract_strided_slice %380 {offsets = [2, 0], sizes = [2, 256], strides = [1, 1]} : vector<8x256xf32> to vector<2x256xf32>
    %388 = arith.addf %386, %387 : vector<2x256xf32>
    %389 = vector.extract_strided_slice %380 {offsets = [4, 0], sizes = [2, 256], strides = [1, 1]} : vector<8x256xf32> to vector<2x256xf32>
    %390 = arith.addf %388, %389 : vector<2x256xf32>
    %391 = vector.extract_strided_slice %380 {offsets = [6, 0], sizes = [2, 256], strides = [1, 1]} : vector<8x256xf32> to vector<2x256xf32>
    %392 = arith.addf %390, %391 : vector<2x256xf32>
    %c40 = arith.constant 40 : index
    %393 = memref.load %arg3[%c40] : memref<42xf32, #tpu.memory_space<smem>>
    %394 = vector.broadcast %393 : f32 to vector<2x256xf32>
    %395 = arith.addf %392, %394 : vector<2x256xf32>
    %396 = arith.negf %395 : vector<2x256xf32>
    %397 = math.exp %396 : vector<2x256xf32>
    %cst_115 = arith.constant 1.000000e+00 : f32
    %398 = vector.broadcast %cst_115 : f32 to vector<2x256xf32>
    %399 = arith.addf %398, %397 : vector<2x256xf32>
    %400 = arith.divf %398, %399 : vector<2x256xf32>
    %401 = vector.extract_strided_slice %385 {offsets = [0, 0], sizes = [2, 256], strides = [1, 1]} : vector<8x256xf32> to vector<2x256xf32>
    %402 = vector.extract_strided_slice %385 {offsets = [2, 0], sizes = [2, 256], strides = [1, 1]} : vector<8x256xf32> to vector<2x256xf32>
    %403 = arith.addf %401, %402 : vector<2x256xf32>
    %404 = vector.extract_strided_slice %385 {offsets = [4, 0], sizes = [2, 256], strides = [1, 1]} : vector<8x256xf32> to vector<2x256xf32>
    %405 = arith.addf %403, %404 : vector<2x256xf32>
    %406 = vector.extract_strided_slice %385 {offsets = [6, 0], sizes = [2, 256], strides = [1, 1]} : vector<8x256xf32> to vector<2x256xf32>
    %407 = arith.addf %405, %406 : vector<2x256xf32>
    %c41 = arith.constant 41 : index
    %408 = memref.load %arg3[%c41] : memref<42xf32, #tpu.memory_space<smem>>
    %409 = vector.broadcast %408 : f32 to vector<2x256xf32>
    %410 = arith.addf %407, %409 : vector<2x256xf32>
    %411 = arith.negf %410 : vector<2x256xf32>
    %412 = math.exp %411 : vector<2x256xf32>
    %cst_116 = arith.constant 1.000000e+00 : f32
    %413 = vector.broadcast %cst_116 : f32 to vector<2x256xf32>
    %414 = arith.addf %413, %412 : vector<2x256xf32>
    %415 = arith.divf %413, %414 : vector<2x256xf32>
    %416 = vector.extract_strided_slice %0 {offsets = [0, 0], sizes = [4, 256], strides = [1, 1]} : vector<8x256xf32> to vector<4x256xf32>
    %417 = vector.extract_strided_slice %400 {offsets = [0, 0], sizes = [1, 256], strides = [1, 1]} : vector<2x256xf32> to vector<1x256xf32>
    %418 = vector.broadcast %417 : vector<1x256xf32> to vector<4x256xf32>
    %419 = arith.mulf %416, %418 : vector<4x256xf32>
    %420 = vector.extract_strided_slice %0 {offsets = [4, 0], sizes = [4, 256], strides = [1, 1]} : vector<8x256xf32> to vector<4x256xf32>
    %421 = vector.extract_strided_slice %400 {offsets = [1, 0], sizes = [1, 256], strides = [1, 1]} : vector<2x256xf32> to vector<1x256xf32>
    %422 = vector.broadcast %421 : vector<1x256xf32> to vector<4x256xf32>
    %423 = arith.mulf %420, %422 : vector<4x256xf32>
    %424 = tpu.concatenate %419, %423 in 0 : vector<4x256xf32>, vector<4x256xf32> -> vector<8x256xf32>
    %425 = vector.extract_strided_slice %1 {offsets = [0, 0], sizes = [4, 256], strides = [1, 1]} : vector<8x256xf32> to vector<4x256xf32>
    %426 = vector.extract_strided_slice %415 {offsets = [0, 0], sizes = [1, 256], strides = [1, 1]} : vector<2x256xf32> to vector<1x256xf32>
    %427 = vector.broadcast %426 : vector<1x256xf32> to vector<4x256xf32>
    %428 = arith.mulf %425, %427 : vector<4x256xf32>
    %429 = vector.extract_strided_slice %1 {offsets = [4, 0], sizes = [4, 256], strides = [1, 1]} : vector<8x256xf32> to vector<4x256xf32>
    %430 = vector.extract_strided_slice %415 {offsets = [1, 0], sizes = [1, 256], strides = [1, 1]} : vector<2x256xf32> to vector<1x256xf32>
    %431 = vector.broadcast %430 : vector<1x256xf32> to vector<4x256xf32>
    %432 = arith.mulf %429, %431 : vector<4x256xf32>
    %433 = tpu.concatenate %428, %432 in 0 : vector<4x256xf32>, vector<4x256xf32> -> vector<8x256xf32>
    %c0_117 = arith.constant 0 : index
    %c0_118 = arith.constant 0 : index
    %434 = vector.load %arg4[%c0_117, %c0_118] : memref<8x256xf32, #tpu.memory_space<vmem>>, vector<8x256xf32>
    tpu.vector_store %arg4[%c0_117, %c0_118], %424 {strides = array<i32>} : memref<8x256xf32, #tpu.memory_space<vmem>>, vector<8x256xf32>,
    %c0_119 = arith.constant 0 : index
    %c0_120 = arith.constant 0 : index
    %435 = vector.load %arg5[%c0_119, %c0_120] : memref<8x256xf32, #tpu.memory_space<vmem>>, vector<8x256xf32>
    tpu.vector_store %arg5[%c0_119, %c0_120], %433 {strides = array<i32>} : memref<8x256xf32, #tpu.memory_space<vmem>>, vector<8x256xf32>,
    return
  }
}

</mosaic_0001>

<llo_original>
// kernel: rfam_forward.1
$region0: #{rfam_forward.1}
  #allocation0 [shape = 'u32[]', space=smem, size = 0x4, offset = 0x4, fixed_abs, tag = 'smem constant byte address 0x4 - core index']
  #allocation1 [shape = 'u32[72,128]{1,0:T(1,128)}', space=vmem, size = 0x9000, scoped, tag = 'internal scratch']
  %s0 = inlined_call_operand.vmem [shape: f32[8,256], index: 0, kind: input, shape index: {}]
  %s1 = inlined_call_operand.vmem [shape: f32[8,256], index: 1, kind: input, shape index: {}]
  %s2 = inlined_call_operand.vmem [shape: f32[2,9,8,1], index: 2, kind: input, shape index: {}]
  %s3 = inlined_call_operand.vmem [shape: f32[42], index: 3, kind: input, shape index: {}]
  %s4 = inlined_call_operand.vmem [shape: f32[8,256], index: 4, kind: output, shape index: {0}]
  %s5 = inlined_call_operand.vmem [shape: f32[8,256], index: 5, kind: output, shape index: {1}]
  %6 = xla_tuple %s4, %s5
  %s7 = sld [smem:[#allocation0]]
  $region38: #{rfam_forward.1} parent=0
    _
  %s9 = ssub.s32 1, %s7
  %s10 = scalar_select 0, %s9, %s7
  $region1: #{rfam_forward.1} parent=0
    #allocation2 [shape = 'u8[512]{0}', space=smem, size = 0x200, scoped, tag = 'input window, operand 3, single buffered']
    #allocation3 [shape = 's32[1]{0}', space=sflag, size = 0x4, scoped, tag = 'scoped memory for rfam_forward.1']
    %11 = vsyncpa [#allocation3], 0
    // Predicated region
    $region2: #{rfam_forward.1} parent=1 // pred_check
      _
    $region3: #{rfam_forward.1} parent=1 // pred_check_branch
      %13 = sbr.rel (0) target = $region5
    $region4: #{rfam_forward.1} parent=1 // pred_region
      _
    $region5: #{rfam_forward.1} parent=1 // pred_fallthru
      _
    // Predicated region
    $region6: #{rfam_forward.1} parent=1 // pred_check
      _
    $region7: #{rfam_forward.1} parent=1 // pred_check_branch
      %15 = sbr.rel (0) target = $region9
    $region8: #{rfam_forward.1} parent=1 // pred_region
      _
    $region9: #{rfam_forward.1} parent=1 // pred_fallthru
      _
    // Predicated region
    $region10: #{rfam_forward.1} parent=1 // pred_check
      _
    $region11: #{rfam_forward.1} parent=1 // pred_check_branch
      %17 = sbr.rel (0) target = $region13
    $region12: #{rfam_forward.1} parent=1 // pred_region
      _
    $region13: #{rfam_forward.1} parent=1 // pred_fallthru
      _
    // Predicated region
    $region14: #{rfam_forward.1} parent=1 // pred_check
      _
    $region15: #{rfam_forward.1} parent=1 // pred_check_branch
      %19 = sbr.rel (0) target = $region17
    $region16: #{rfam_forward.1} parent=1 // pred_region
      %21 = vsyncadd [#allocation3], 0
      %s23 = sshll.u32 %s3, 4
      %s24 = int_to_ptr.vmem [resolvable:$true] %s23
      %26 = dma.vmem_to_smem %s24, 16, [#allocation2], [#allocation3]
    $region17: #{rfam_forward.1} parent=1 // pred_fallthru
      _
    // Predicated region
    $region18: #{rfam_forward.1} parent=1 // pred_check
      _
    $region19: #{rfam_forward.1} parent=1 // pred_check_branch
      %28 = sbr.rel (0) target = $region21
    $region20: #{rfam_forward.1} parent=1 // pred_region
      %30 = dma.done [#allocation3], 16
    $region21: #{rfam_forward.1} parent=1 // pred_fallthru
      _
    %31 = sfence
    %v32 = vld [vmem:[%s0] sm:$0xff]
    %v33 = vld [vmem:[%s0 + $0x8] sm:$0xff]
    %v34 = vld [vmem:[%s1] sm:$0xff]
    %v35 = vld [vmem:[%s1 + $0x8] sm:$0xff]
    %v38 = vrot.slane %v32, 3
    %v39 = vrot.slane %v33, 3
    %vm42 = vcmask 1040384
    %v43 = vsel %vm42, %v32, %v38
    %v44 = vsel %vm42, %v33, %v39
    %v45 = vrot.slane %v32, 1
    %v46 = vrot.slane %v33, 1
    %v49 = vrot.slane %v32, 4
    %v50 = vrot.slane %v33, 4
    %v53 = vsel %vm42, %v45, %v49
    %v54 = vsel %vm42, %v46, %v50
    %v55 = vrot.slane %v32, 2
    %v56 = vrot.slane %v33, 2
    %v59 = vrot.slane %v32, 5
    %v60 = vrot.slane %v33, 5
    %v63 = vsel %vm42, %v55, %v59
    %v64 = vsel %vm42, %v56, %v60
    %v65 = vrot.slane %v32, 6
    %v66 = vrot.slane %v33, 6
    %v69 = vsel %vm42, %v38, %v65
    %v70 = vsel %vm42, %v39, %v66
    %v73 = vrot.slane %v34, 3
    %v74 = vrot.slane %v35, 3
    %v77 = vsel %vm42, %v34, %v73
    %v78 = vsel %vm42, %v35, %v74
    %v79 = vrot.slane %v34, 1
    %v80 = vrot.slane %v35, 1
    %v83 = vrot.slane %v34, 4
    %v84 = vrot.slane %v35, 4
    %v87 = vsel %vm42, %v79, %v83
    %v88 = vsel %vm42, %v80, %v84
    %v89 = vrot.slane %v34, 2
    %v90 = vrot.slane %v35, 2
    %v93 = vrot.slane %v34, 5
    %v94 = vrot.slane %v35, 5
    %v97 = vsel %vm42, %v89, %v93
    %v98 = vsel %vm42, %v90, %v94
    %v99 = vrot.slane %v34, 6
    %v100 = vrot.slane %v35, 6
    %v103 = vsel %vm42, %v73, %v99
    %v104 = vsel %vm42, %v74, %v100
    %s105 = sld [smem:[#allocation2]]
    %v106 = vstv %s105
    %v107 = vmul.f32 %v106, %v43
    %v108 = vmul.f32 %v106, %v44
    %s109 = sld [smem:[#allocation2 + $0x1]]
    %v110 = vstv %s109
    %v111 = vmul.f32 %v110, %v53
    %v112 = vmul.f32 %v110, %v54
    %v113 = vadd.f32 %v107, %v111
    %v114 = vadd.f32 %v108, %v112
    %s115 = sld [smem:[#allocation2 + $0x2]]
    %v116 = vstv %s115
    %v117 = vmul.f32 %v116, %v63
    %v118 = vmul.f32 %v116, %v64
    %v119 = vadd.f32 %v113, %v117
    %v120 = vadd.f32 %v114, %v118
    %s121 = sld [smem:[#allocation2 + $0x3]]
    %v122 = vstv %s121
    %v123 = vmul.f32 %v122, %v69
    %v124 = vmul.f32 %v122, %v70
    %v125 = vadd.f32 %v119, %v123
    %v126 = vadd.f32 %v120, %v124
    %s127 = sld [smem:[#allocation2 + $0x4]]
    %v128 = vstv %s127
    %v129 = vmul.f32 %v128, %v77
    %v130 = vmul.f32 %v128, %v78
    %v131 = vadd.f32 %v125, %v129
    %v132 = vadd.f32 %v126, %v130
    %s133 = sld [smem:[#allocation2 + $0x5]]
    %v134 = vstv %s133
    %v135 = vmul.f32 %v134, %v87
    %v136 = vmul.f32 %v134, %v88
    %v137 = vadd.f32 %v131, %v135
    %v138 = vadd.f32 %v132, %v136
    %s139 = sld [smem:[#allocation2 + $0x6]]
    %v140 = vstv %s139
    %v141 = vmul.f32 %v140, %v97
    %v142 = vmul.f32 %v140, %v98
    %v143 = vadd.f32 %v137, %v141
    %v144 = vadd.f32 %v138, %v142
    %s145 = sld [smem:[#allocation2 + $0x7]]
    %v146 = vstv %s145
    %v147 = vmul.f32 %v146, %v103
    %v148 = vmul.f32 %v146, %v104
    %v149 = vadd.f32 %v143, %v147
    %v150 = vadd.f32 %v144, %v148
    %vm151 = vcmask 1041408
    %v152 = vsel %vm151, %v149, 0.0
    %v153 = vsel %vm151, %v150, 0.0
    %v154 = vadd.f32 %v152, %v153
    %155 = vadd.xlane.f32.xlu0 %v154
    %v156 = vpop.xlane.xlu0 %155
    %v157 = vrot.slane %v156, 4
    %v158 = vadd.f32 %v156, %v157
    %v159 = vrot.slane %v158, 2
    %v160 = vadd.f32 %v158, %v159
    %v161 = vrot.slane %v160, 1
    %v162 = vadd.f32 %v160, %v161
    %s163 = vtos %v162
    %s164 = smul.f32 %s163, 0.001953125
    %v165 = vmul.f32 %v149, %v149
    %v166 = vmul.f32 %v150, %v150
    %v167 = vsel %vm151, %v165, 0.0
    %v168 = vsel %vm151, %v166, 0.0
    %v169 = vadd.f32 %v167, %v168
    %170 = vadd.xlane.f32.xlu0 %v169
    %v171 = vpop.xlane.xlu0 %170
    %v172 = vrot.slane %v171, 4
    %v173 = vadd.f32 %v171, %v172
    %v174 = vrot.slane %v173, 2
    %v175 = vadd.f32 %v173, %v174
    %v176 = vrot.slane %v175, 1
    %v177 = vadd.f32 %v175, %v176
    %s178 = vtos %v177
    %s179 = smul.f32 %s178, 0.001953125
    %s180 = smul.f32 %s164, %s164
    %s181 = ssub.f32 %s179, %s180
    %s182 = smax.f32 %s181, 0.0
    %s183 = sld [smem:[#allocation2 + $0x20]]
    %s184 = sadd.f32 %s182, 1e-05
    %v185 = vstv %s184
    %v186 = vrsqrt.pop %v185
    %v187 = vmul.f32 %v186, %v185
    %v188 = vmul.f32 %v187, %v186
    %v189 = vmul.f32 0.5, %v188
    %v190 = vsub.f32 1.5, %v189
    %v191 = vmul.f32 %v186, %v190
    %vm192 = vweird.f32 %v185
    %vm193 = vweird.f32 %v186
    %vm194 = vmor %vm192, %vm193
    %v195 = vsel %vm194, %v186, %v191
    %s196 = vtos %v195
    %s197 = smul.f32 %s183, %s196
    %s198 = sld [smem:[#allocation2 + $0x24]]
    %s199 = smul.f32 %s164, %s197
    %s200 = ssub.f32 %s198, %s199
    %v201 = vstv %s197
    %v202 = vmul.f32 %v149, %v201
    %v203 = vmul.f32 %v150, %v201
    %v204 = vstv %s200
    %v205 = vadd.f32 %v202, %v204
    %v206 = vadd.f32 %v203, %v204
    %v207 = vmax.f32 %v205, 0.0
    %v208 = vmax.f32 %v206, 0.0
    %s209 = sld [smem:[#allocation2 + $0x8]]
    %v210 = vstv %s209
    %v211 = vmul.f32 %v210, %v43
    %v212 = vmul.f32 %v210, %v44
    %s213 = sld [smem:[#allocation2 + $0x9]]
    %v214 = vstv %s213
    %v215 = vmul.f32 %v214, %v53
    %v216 = vmul.f32 %v214, %v54
    %v217 = vadd.f32 %v211, %v215
    %v218 = vadd.f32 %v212, %v216
    %s219 = sld [smem:[#allocation2 + $0xa]]
    %v220 = vstv %s219
    %v221 = vmul.f32 %v220, %v63
    %v222 = vmul.f32 %v220, %v64
    %v223 = vadd.f32 %v217, %v221
    %v224 = vadd.f32 %v218, %v222
    %s225 = sld [smem:[#allocation2 + $0xb]]
    %v226 = vstv %s225
    %v227 = vmul.f32 %v226, %v69
    %v228 = vmul.f32 %v226, %v70
    %v229 = vadd.f32 %v223, %v227
    %v230 = vadd.f32 %v224, %v228
    %s231 = sld [smem:[#allocation2 + $0xc]]
    %v232 = vstv %s231
    %v233 = vmul.f32 %v232, %v77
    %v234 = vmul.f32 %v232, %v78
    %v235 = vadd.f32 %v229, %v233
    %v236 = vadd.f32 %v230, %v234
    %s237 = sld [smem:[#allocation2 + $0xd]]
    %v238 = vstv %s237
    %v239 = vmul.f32 %v238, %v87
    %v240 = vmul.f32 %v238, %v88
    %v241 = vadd.f32 %v235, %v239
    %v242 = vadd.f32 %v236, %v240
    %s243 = sld [smem:[#allocation2 + $0xe]]
    %v244 = vstv %s243
    %v245 = vmul.f32 %v244, %v97
    %v246 = vmul.f32 %v244, %v98
    %v247 = vadd.f32 %v241, %v245
    %v248 = vadd.f32 %v242, %v246
    %s249 = sld [smem:[#allocation2 + $0xf]]
    %v250 = vstv %s249
    %v251 = vmul.f32 %v250, %v103
    %v252 = vmul.f32 %v250, %v104
    %v253 = vadd.f32 %v247, %v251
    %v254 = vadd.f32 %v248, %v252
    %v255 = vsel %vm151, %v253, 0.0
    %v256 = vsel %vm151, %v254, 0.0
    %v257 = vadd.f32 %v255, %v256
    %258 = vadd.xlane.f32.xlu0 %v257
    %v259 = vpop.xlane.xlu0 %258
    %v260 = vrot.slane %v259, 4
    %v261 = vadd.f32 %v259, %v260
    %v262 = vrot.slane %v261, 2
    %v263 = vadd.f32 %v261, %v262
    %v264 = vrot.slane %v263, 1
    %v265 = vadd.f32 %v263, %v264
    %s266 = vtos %v265
    %s267 = smul.f32 %s266, 0.001953125
    %v268 = vmul.f32 %v253, %v253
    %v269 = vmul.f32 %v254, %v254
    %v270 = vsel %vm151, %v268, 0.0
    %v271 = vsel %vm151, %v269, 0.0
    %v272 = vadd.f32 %v270, %v271
    %273 = vadd.xlane.f32.xlu0 %v272
    %v274 = vpop.xlane.xlu0 %273
    %v275 = vrot.slane %v274, 4
    %v276 = vadd.f32 %v274, %v275
    %v277 = vrot.slane %v276, 2
    %v278 = vadd.f32 %v276, %v277
    %v279 = vrot.slane %v278, 1
    %v280 = vadd.f32 %v278, %v279
    %s281 = vtos %v280
    %s282 = smul.f32 %s281, 0.001953125
    %s283 = smul.f32 %s267, %s267
    %s284 = ssub.f32 %s282, %s283
    %s285 = smax.f32 %s284, 0.0
    %s286 = sld [smem:[#allocation2 + $0x21]]
    %s287 = sadd.f32 %s285, 1e-05
    %v288 = vstv %s287
    %v289 = vrsqrt.pop %v288
    %v290 = vmul.f32 %v289, %v288
    %v291 = vmul.f32 %v290, %v289
    %v292 = vmul.f32 0.5, %v291
    %v293 = vsub.f32 1.5, %v292
    %v294 = vmul.f32 %v289, %v293
    %vm295 = vweird.f32 %v288
    %vm296 = vweird.f32 %v289
    %vm297 = vmor %vm295, %vm296
    %v298 = vsel %vm297, %v289, %v294
    %s299 = vtos %v298
    %s300 = smul.f32 %s286, %s299
    %s301 = sld [smem:[#allocation2 + $0x25]]
    %s302 = smul.f32 %s267, %s300
    %s303 = ssub.f32 %s301, %s302
    %v304 = vstv %s300
    %v305 = vmul.f32 %v253, %v304
    %v306 = vmul.f32 %v254, %v304
    %v307 = vstv %s303
    %v308 = vadd.f32 %v305, %v307
    %v309 = vadd.f32 %v306, %v307
    %v310 = vmax.f32 %v308, 0.0
    %v311 = vmax.f32 %v309, 0.0
    %s312 = sld [smem:[#allocation2 + $0x10]]
    %v313 = vstv %s312
    %v314 = vmul.f32 %v313, %v43
    %v315 = vmul.f32 %v313, %v44
    %s316 = sld [smem:[#allocation2 + $0x11]]
    %v317 = vstv %s316
    %v318 = vmul.f32 %v317, %v53
    %v319 = vmul.f32 %v317, %v54
    %v320 = vadd.f32 %v314, %v318
    %v321 = vadd.f32 %v315, %v319
    %s322 = sld [smem:[#allocation2 + $0x12]]
    %v323 = vstv %s322
    %v324 = vmul.f32 %v323, %v63
    %v325 = vmul.f32 %v323, %v64
    %v326 = vadd.f32 %v320, %v324
    %v327 = vadd.f32 %v321, %v325
    %s328 = sld [smem:[#allocation2 + $0x13]]
    %v329 = vstv %s328
    %v330 = vmul.f32 %v329, %v69
    %v331 = vmul.f32 %v329, %v70
    %v332 = vadd.f32 %v326, %v330
    %v333 = vadd.f32 %v327, %v331
    %s334 = sld [smem:[#allocation2 + $0x14]]
    %v335 = vstv %s334
    %v336 = vmul.f32 %v335, %v77
    %v337 = vmul.f32 %v335, %v78
    %v338 = vadd.f32 %v332, %v336
    %v339 = vadd.f32 %v333, %v337
    %s340 = sld [smem:[#allocation2 + $0x15]]
    %v341 = vstv %s340
    %v342 = vmul.f32 %v341, %v87
    %v343 = vmul.f32 %v341, %v88
    %v344 = vadd.f32 %v338, %v342
    %v345 = vadd.f32 %v339, %v343
    %s346 = sld [smem:[#allocation2 + $0x16]]
    %v347 = vstv %s346
    %v348 = vmul.f32 %v347, %v97
    %v349 = vmul.f32 %v347, %v98
    %v350 = vadd.f32 %v344, %v348
    %v351 = vadd.f32 %v345, %v349
    %s352 = sld [smem:[#allocation2 + $0x17]]
    %v353 = vstv %s352
    %v354 = vmul.f32 %v353, %v103
    %v355 = vmul.f32 %v353, %v104
    %v356 = vadd.f32 %v350, %v354
    %v357 = vadd.f32 %v351, %v355
    %v358 = vsel %vm151, %v356, 0.0
    %v359 = vsel %vm151, %v357, 0.0
    %v360 = vadd.f32 %v358, %v359
    %361 = vadd.xlane.f32.xlu0 %v360
    %v362 = vpop.xlane.xlu0 %361
    %v363 = vrot.slane %v362, 4
    %v364 = vadd.f32 %v362, %v363
    %v365 = vrot.slane %v364, 2
    %v366 = vadd.f32 %v364, %v365
    %v367 = vrot.slane %v366, 1
    %v368 = vadd.f32 %v366, %v367
    %s369 = vtos %v368
    %s370 = smul.f32 %s369, 0.001953125
    %v371 = vmul.f32 %v356, %v356
    %v372 = vmul.f32 %v357, %v357
    %v373 = vsel %vm151, %v371, 0.0
    %v374 = vsel %vm151, %v372, 0.0
    %v375 = vadd.f32 %v373, %v374
    %376 = vadd.xlane.f32.xlu0 %v375
    %v377 = vpop.xlane.xlu0 %376
    %v378 = vrot.slane %v377, 4
    %v379 = vadd.f32 %v377, %v378
    %v380 = vrot.slane %v379, 2
    %v381 = vadd.f32 %v379, %v380
    %v382 = vrot.slane %v381, 1
    %v383 = vadd.f32 %v381, %v382
    %s384 = vtos %v383
    %s385 = smul.f32 %s384, 0.001953125
    %s386 = smul.f32 %s370, %s370
    %s387 = ssub.f32 %s385, %s386
    %s388 = smax.f32 %s387, 0.0
    %s389 = sld [smem:[#allocation2 + $0x22]]
    %s390 = sadd.f32 %s388, 1e-05
    %v391 = vstv %s390
    %v392 = vrsqrt.pop %v391
    %v393 = vmul.f32 %v392, %v391
    %v394 = vmul.f32 %v393, %v392
    %v395 = vmul.f32 0.5, %v394
    %v396 = vsub.f32 1.5, %v395
    %v397 = vmul.f32 %v392, %v396
    %vm398 = vweird.f32 %v391
    %vm399 = vweird.f32 %v392
    %vm400 = vmor %vm398, %vm399
    %v401 = vsel %vm400, %v392, %v397
    %s402 = vtos %v401
    %s403 = smul.f32 %s389, %s402
    %s404 = sld [smem:[#allocation2 + $0x26]]
    %s405 = smul.f32 %s370, %s403
    %s406 = ssub.f32 %s404, %s405
    %v407 = vstv %s403
    %v408 = vmul.f32 %v356, %v407
    %v409 = vmul.f32 %v357, %v407
    %v410 = vstv %s406
    %v411 = vadd.f32 %v408, %v410
    %v412 = vadd.f32 %v409, %v410
    %v413 = vmax.f32 %v411, 0.0
    %v414 = vmax.f32 %v412, 0.0
    %s415 = sld [smem:[#allocation2 + $0x18]]
    %v416 = vstv %s415
    %v417 = vmul.f32 %v416, %v43
    %v418 = vmul.f32 %v416, %v44
    %s419 = sld [smem:[#allocation2 + $0x19]]
    %v420 = vstv %s419
    %v421 = vmul.f32 %v420, %v53
    %v422 = vmul.f32 %v420, %v54
    %v423 = vadd.f32 %v417, %v421
    %v424 = vadd.f32 %v418, %v422
    %s425 = sld [smem:[#allocation2 + $0x1a]]
    %v426 = vstv %s425
    %v427 = vmul.f32 %v426, %v63
    %v428 = vmul.f32 %v426, %v64
    %v429 = vadd.f32 %v423, %v427
    %v430 = vadd.f32 %v424, %v428
    %s431 = sld [smem:[#allocation2 + $0x1b]]
    %v432 = vstv %s431
    %v433 = vmul.f32 %v432, %v69
    %v434 = vmul.f32 %v432, %v70
    %v435 = vadd.f32 %v429, %v433
    %v436 = vadd.f32 %v430, %v434
    %s437 = sld [smem:[#allocation2 + $0x1c]]
    %v438 = vstv %s437
    %v439 = vmul.f32 %v438, %v77
    %v440 = vmul.f32 %v438, %v78
    %v441 = vadd.f32 %v435, %v439
    %v442 = vadd.f32 %v436, %v440
    %s443 = sld [smem:[#allocation2 + $0x1d]]
    %v444 = vstv %s443
    %v445 = vmul.f32 %v444, %v87
    %v446 = vmul.f32 %v444, %v88
    %v447 = vadd.f32 %v441, %v445
    %v448 = vadd.f32 %v442, %v446
    %s449 = sld [smem:[#allocation2 + $0x1e]]
    %v450 = vstv %s449
    %v451 = vmul.f32 %v450, %v97
    %v452 = vmul.f32 %v450, %v98
    %v453 = vadd.f32 %v447, %v451
    %v454 = vadd.f32 %v448, %v452
    %s455 = sld [smem:[#allocation2 + $0x1f]]
    %v456 = vstv %s455
    %v457 = vmul.f32 %v456, %v103
    %v458 = vmul.f32 %v456, %v104
    %v459 = vadd.f32 %v453, %v457
    %v460 = vadd.f32 %v454, %v458
    %v461 = vsel %vm151, %v459, 0.0
    %v462 = vsel %vm151, %v460, 0.0
    %v463 = vadd.f32 %v461, %v462
    %464 = vadd.xlane.f32.xlu0 %v463
    %v465 = vpop.xlane.xlu0 %464
    %v466 = vrot.slane %v465, 4
    %v467 = vadd.f32 %v465, %v466
    %v468 = vrot.slane %v467, 2
    %v469 = vadd.f32 %v467, %v468
    %v470 = vrot.slane %v469, 1
    %v471 = vadd.f32 %v469, %v470
    %s472 = vtos %v471
    %s473 = smul.f32 %s472, 0.001953125
    %v474 = vmul.f32 %v459, %v459
    %v475 = vmul.f32 %v460, %v460
    %v476 = vsel %vm151, %v474, 0.0
    %v477 = vsel %vm151, %v475, 0.0
    %v478 = vadd.f32 %v476, %v477
    %479 = vadd.xlane.f32.xlu0 %v478
    %v480 = vpop.xlane.xlu0 %479
    %v481 = vrot.slane %v480, 4
    %v482 = vadd.f32 %v480, %v481
    %v483 = vrot.slane %v482, 2
    %v484 = vadd.f32 %v482, %v483
    %v485 = vrot.slane %v484, 1
    %v486 = vadd.f32 %v484, %v485
    %s487 = vtos %v486
    %s488 = smul.f32 %s487, 0.001953125
    %s489 = smul.f32 %s473, %s473
    %s490 = ssub.f32 %s488, %s489
    %s491 = smax.f32 %s490, 0.0
    %s492 = sld [smem:[#allocation2 + $0x23]]
    %s493 = sadd.f32 %s491, 1e-05
    %v494 = vstv %s493
    %v495 = vrsqrt.pop %v494
    %v496 = vmul.f32 %v495, %v494
    %v497 = vmul.f32 %v496, %v495
    %v498 = vmul.f32 0.5, %v497
    %v499 = vsub.f32 1.5, %v498
    %v500 = vmul.f32 %v495, %v499
    %vm501 = vweird.f32 %v494
    %vm502 = vweird.f32 %v495
    %vm503 = vmor %vm501, %vm502
    %v504 = vsel %vm503, %v495, %v500
    %s505 = vtos %v504
    %s506 = smul.f32 %s492, %s505
    %s507 = sld [smem:[#allocation2 + $0x27]]
    %s508 = smul.f32 %s473, %s506
    %s509 = ssub.f32 %s507, %s508
    %v510 = vstv %s506
    %v511 = vmul.f32 %v459, %v510
    %v512 = vmul.f32 %v460, %v510
    %v513 = vstv %s509
    %v514 = vadd.f32 %v511, %v513
    %v515 = vadd.f32 %v512, %v513
    %v516 = vmax.f32 %v514, 0.0
    %v517 = vmax.f32 %v515, 0.0
    %v520 = vrot.slane %v310, 6
    %v521 = vrot.slane %v311, 6
    %v526 = vrot.slane %v413, 4
    %v527 = vrot.slane %v414, 4
    %v532 = vrot.slane %v516, 2
    %v533 = vrot.slane %v517, 2
    %v536 = vsel %vm151, %v207, %v520
    %v537 = vsel %vm151, %v208, %v521
    %vm538 = vcmask 1043456
    %v539 = vsel %vm538, %v536, %v526
    %v540 = vsel %vm538, %v537, %v527
    %vm541 = vcmask 1045504
    %v542 = vsel %vm541, %v539, %v532
    %v543 = vsel %vm541, %v540, %v533
    %v544 = vlaneseq
    %v545 = vand.u32 %v544, 127
    %v546 = vadd.s32 %v545, 128
    %v547 = vand.u32 %v545, 15
    %v548 = vand.u32 %v546, 15
    %vm549 = vcmp.ge.s32.totalorder %v545, 16
    %vm550 = vcmp.ge.s32.totalorder %v546, 16
    %vm551 = vcmp.lt.s32.totalorder %v545, 240
    %vm552 = vcmp.lt.s32.totalorder %v546, 240
    %vm553 = vcmp.ge.s32.totalorder %v547, 1
    %vm554 = vcmp.ge.s32.totalorder %v548, 1
    %vm555 = vcmp.le.s32.totalorder %v547, 14
    %vm556 = vcmp.le.s32.totalorder %v548, 14
    %s557 = scalar_lea.vmem %s2, 32
    %v558 = vld [vmem:[%s557] sm:$0xff]
    %560 = vset.pattern.permute.xlu0 0
    %561 = vperm.xlu0 %560, %v558
    %v562 = vpop.permute.xlu0 %561
    %v564 = vmul.f32 %v562, %v542
    %v565 = vmul.f32 %v562, %v543
    %s566 = scalar_lea.vmem %s2, 104
    %v567 = vld [vmem:[%s566] sm:$0xff]
    %569 = vset.pattern.permute.xlu0 0
    %570 = vperm.xlu0 %569, %v567
    %v571 = vpop.permute.xlu0 %570
    %v573 = vmul.f32 %v571, %v542
    %v574 = vmul.f32 %v571, %v543
    %575 = vrot.lane.b32.xlu0 %v542, 17
    %v576 = vpop.permute.xlu0 %575
    %577 = vrot.lane.b32.xlu0 %v543, 17
    %v578 = vpop.permute.xlu0 %577
    %vm579 = vcmp.lt.s32.totalorder %v545, 17
    %v580 = vsel %vm579, %v576, %v578
    %v581 = vsel %vm579, %v578, %v576
    %vm582 = vmand %vm549, %vm553
    %vm583 = vmand %vm550, %vm554
    %v584 = vsel %vm582, %v581, 0.0
    %v585 = vsel %vm583, %v580, 0.0
    %v586 = vld [vmem:[%s2] sm:$0xff]
    %588 = vset.pattern.permute.xlu0 0
    %589 = vperm.xlu0 %588, %v586
    %v590 = vpop.permute.xlu0 %589
    %v592 = vmul.f32 %v590, %v584
    %v593 = vmul.f32 %v590, %v585
    %v594 = vadd.f32 %v564, %v592
    %v595 = vadd.f32 %v565, %v593
    %s596 = scalar_lea.vmem %s2, 72
    %v597 = vld [vmem:[%s596] sm:$0xff]
    %599 = vset.pattern.permute.xlu0 0
    %600 = vperm.xlu0 %599, %v597
    %v601 = vpop.permute.xlu0 %600
    %v603 = vmul.f32 %v601, %v584
    %v604 = vmul.f32 %v601, %v585
    %v605 = vadd.f32 %v573, %v603
    %v606 = vadd.f32 %v574, %v604
    %607 = vrot.lane.b32.xlu0 %v542, 16
    %v608 = vpop.permute.xlu0 %607
    %609 = vrot.lane.b32.xlu0 %v543, 16
    %v610 = vpop.permute.xlu0 %609
    %vm611 = vcmp.lt.s32.totalorder %v545, 16
    %v612 = vsel %vm611, %v608, %v610
    %v613 = vsel %vm611, %v610, %v608
    %v614 = vsel %vm549, %v613, 0.0
    %v615 = vsel %vm550, %v612, 0.0
    %s616 = scalar_lea.vmem %s2, 8
    %v617 = vld [vmem:[%s616] sm:$0xff]
    %619 = vset.pattern.permute.xlu0 0
    %620 = vperm.xlu0 %619, %v617
    %v621 = vpop.permute.xlu0 %620
    %v623 = vmul.f32 %v621, %v614
    %v624 = vmul.f32 %v621, %v615
    %v625 = vadd.f32 %v594, %v623
    %v626 = vadd.f32 %v595, %v624
    %s627 = scalar_lea.vmem %s2, 80
    %v628 = vld [vmem:[%s627] sm:$0xff]
    %630 = vset.pattern.permute.xlu0 0
    %631 = vperm.xlu0 %630, %v628
    %v632 = vpop.permute.xlu0 %631
    %v634 = vmul.f32 %v632, %v614
    %v635 = vmul.f32 %v632, %v615
    %v636 = vadd.f32 %v605, %v634
    %v637 = vadd.f32 %v606, %v635
    %638 = vrot.lane.b32.xlu0 %v542, 15
    %v639 = vpop.permute.xlu0 %638
    %640 = vrot.lane.b32.xlu0 %v543, 15
    %v641 = vpop.permute.xlu0 %640
    %vm642 = vcmp.lt.s32.totalorder %v545, 15
    %v643 = vsel %vm642, %v639, %v641
    %v644 = vsel %vm642, %v641, %v639
    %vm645 = vmand %vm549, %vm555
    %vm646 = vmand %vm550, %vm556
    %v647 = vsel %vm645, %v644, 0.0
    %v648 = vsel %vm646, %v643, 0.0
    %s649 = scalar_lea.vmem %s2, 16
    %v650 = vld [vmem:[%s649] sm:$0xff]
    %652 = vset.pattern.permute.xlu0 0
    %653 = vperm.xlu0 %652, %v650
    %v654 = vpop.permute.xlu0 %653
    %v656 = vmul.f32 %v654, %v647
    %v657 = vmul.f32 %v654, %v648
    %v658 = vadd.f32 %v625, %v656
    %v659 = vadd.f32 %v626, %v657
    %s660 = scalar_lea.vmem %s2, 88
    %v661 = vld [vmem:[%s660] sm:$0xff]
    %663 = vset.pattern.permute.xlu0 0
    %664 = vperm.xlu0 %663, %v661
    %v665 = vpop.permute.xlu0 %664
    %v667 = vmul.f32 %v665, %v647
    %v668 = vmul.f32 %v665, %v648
    %v669 = vadd.f32 %v636, %v667
    %v670 = vadd.f32 %v637, %v668
    %671 = vrot.lane.b32.xlu0 %v542, 1
    %v672 = vpop.permute.xlu0 %671
    %673 = vrot.lane.b32.xlu0 %v543, 1
    %v674 = vpop.permute.xlu0 %673
    %vm675 = vcmp.lt.s32.totalorder %v545, 1
    %v676 = vsel %vm675, %v672, %v674
    %v677 = vsel %vm675, %v674, %v672
    %v678 = vsel %vm553, %v677, 0.0
    %v679 = vsel %vm554, %v676, 0.0
    %s680 = scalar_lea.vmem %s2, 24
    %v681 = vld [vmem:[%s680] sm:$0xff]
    %683 = vset.pattern.permute.xlu0 0
    %684 = vperm.xlu0 %683, %v681
    %v685 = vpop.permute.xlu0 %684
    %v687 = vmul.f32 %v685, %v678
    %v688 = vmul.f32 %v685, %v679
    %v689 = vadd.f32 %v658, %v687
    %v690 = vadd.f32 %v659, %v688
    %s691 = scalar_lea.vmem %s2, 96
    %v692 = vld [vmem:[%s691] sm:$0xff]
    %694 = vset.pattern.permute.xlu0 0
    %695 = vperm.xlu0 %694, %v692
    %v696 = vpop.permute.xlu0 %695
    %v698 = vmul.f32 %v696, %v678
    %v699 = vmul.f32 %v696, %v679
    %v700 = vadd.f32 %v669, %v698
    %v701 = vadd.f32 %v670, %v699
    %702 = vrot.lane.b32.xlu0 %v542, 127
    %v703 = vpop.permute.xlu0 %702
    %704 = vrot.lane.b32.xlu0 %v543, 127
    %v705 = vpop.permute.xlu0 %704
    %vm706 = vcmp.lt.s32.totalorder %v545, 127
    %v707 = vsel %vm706, %v703, %v705
    %v708 = vsel %vm706, %v705, %v703
    %v709 = vsel %vm555, %v707, 0.0
    %v710 = vsel %vm556, %v708, 0.0
    %s711 = scalar_lea.vmem %s2, 40
    %v712 = vld [vmem:[%s711] sm:$0xff]
    %714 = vset.pattern.permute.xlu0 0
    %715 = vperm.xlu0 %714, %v712
    %v716 = vpop.permute.xlu0 %715
    %v718 = vmul.f32 %v716, %v709
    %v719 = vmul.f32 %v716, %v710
    %v720 = vadd.f32 %v689, %v718
    %v721 = vadd.f32 %v690, %v719
    %s722 = scalar_lea.vmem %s2, 112
    %v723 = vld [vmem:[%s722] sm:$0xff]
    %725 = vset.pattern.permute.xlu0 0
    %726 = vperm.xlu0 %725, %v723
    %v727 = vpop.permute.xlu0 %726
    %v729 = vmul.f32 %v727, %v709
    %v730 = vmul.f32 %v727, %v710
    %v731 = vadd.f32 %v700, %v729
    %v732 = vadd.f32 %v701, %v730
    %733 = vrot.lane.b32.xlu0 %v542, 113
    %v734 = vpop.permute.xlu0 %733
    %735 = vrot.lane.b32.xlu0 %v543, 113
    %v736 = vpop.permute.xlu0 %735
    %vm737 = vcmp.lt.s32.totalorder %v545, 113
    %v738 = vsel %vm737, %v734, %v736
    %v739 = vsel %vm737, %v736, %v734
    %vm740 = vmand %vm551, %vm553
    %vm741 = vmand %vm552, %vm554
    %v742 = vsel %vm740, %v738, 0.0
    %v743 = vsel %vm741, %v739, 0.0
    %s744 = scalar_lea.vmem %s2, 48
    %v745 = vld [vmem:[%s744] sm:$0xff]
    %747 = vset.pattern.permute.xlu0 0
    %748 = vperm.xlu0 %747, %v745
    %v749 = vpop.permute.xlu0 %748
    %v751 = vmul.f32 %v749, %v742
    %v752 = vmul.f32 %v749, %v743
    %v753 = vadd.f32 %v720, %v751
    %v754 = vadd.f32 %v721, %v752
    %s755 = scalar_lea.vmem %s2, 120
    %v756 = vld [vmem:[%s755] sm:$0xff]
    %758 = vset.pattern.permute.xlu0 0
    %759 = vperm.xlu0 %758, %v756
    %v760 = vpop.permute.xlu0 %759
    %v762 = vmul.f32 %v760, %v742
    %v763 = vmul.f32 %v760, %v743
    %v764 = vadd.f32 %v731, %v762
    %v765 = vadd.f32 %v732, %v763
    %766 = vrot.lane.b32.xlu0 %v542, 112
    %v767 = vpop.permute.xlu0 %766
    %768 = vrot.lane.b32.xlu0 %v543, 112
    %v769 = vpop.permute.xlu0 %768
    %vm770 = vcmp.lt.s32.totalorder %v545, 112
    %v771 = vsel %vm770, %v767, %v769
    %v772 = vsel %vm770, %v769, %v767
    %v773 = vsel %vm551, %v771, 0.0
    %v774 = vsel %vm552, %v772, 0.0
    %s775 = scalar_lea.vmem %s2, 56
    %v776 = vld [vmem:[%s775] sm:$0xff]
    %778 = vset.pattern.permute.xlu0 0
    %779 = vperm.xlu0 %778, %v776
    %v780 = vpop.permute.xlu0 %779
    %v782 = vmul.f32 %v780, %v773
    %v783 = vmul.f32 %v780, %v774
    %v784 = vadd.f32 %v753, %v782
    %v785 = vadd.f32 %v754, %v783
    %s786 = scalar_lea.vmem %s2, 128
    %v787 = vld [vmem:[%s786] sm:$0xff]
    %789 = vset.pattern.permute.xlu0 0
    %790 = vperm.xlu0 %789, %v787
    %v791 = vpop.permute.xlu0 %790
    %v793 = vmul.f32 %v791, %v773
    %v794 = vmul.f32 %v791, %v774
    %v795 = vadd.f32 %v764, %v793
    %v796 = vadd.f32 %v765, %v794
    %797 = vrot.lane.b32.xlu0 %v542, 111
    %v798 = vpop.permute.xlu0 %797
    %799 = vrot.lane.b32.xlu0 %v543, 111
    %v800 = vpop.permute.xlu0 %799
    %vm801 = vcmp.lt.s32.totalorder %v545, 111
    %v802 = vsel %vm801, %v798, %v800
    %v803 = vsel %vm801, %v800, %v798
    %vm804 = vmand %vm551, %vm555
    %vm805 = vmand %vm552, %vm556
    %v806 = vsel %vm804, %v802, 0.0
    %v807 = vsel %vm805, %v803, 0.0
    %s808 = scalar_lea.vmem %s2, 64
    %v809 = vld [vmem:[%s808] sm:$0xff]
    %811 = vset.pattern.permute.xlu0 0
    %812 = vperm.xlu0 %811, %v809
    %v813 = vpop.permute.xlu0 %812
    %v815 = vmul.f32 %v813, %v806
    %v816 = vmul.f32 %v813, %v807
    %v817 = vadd.f32 %v784, %v815
    %v818 = vadd.f32 %v785, %v816
    %s819 = scalar_lea.vmem %s2, 136
    %v820 = vld [vmem:[%s819] sm:$0xff]
    %822 = vset.pattern.permute.xlu0 0
    %823 = vperm.xlu0 %822, %v820
    %v824 = vpop.permute.xlu0 %823
    %v826 = vmul.f32 %v824, %v806
    %v827 = vmul.f32 %v824, %v807
    %v828 = vadd.f32 %v795, %v826
    %v829 = vadd.f32 %v796, %v827
    %v832 = vrot.slane %v817, 2
    %v833 = vrot.slane %v818, 2
    %v836 = vadd.f32 %v817, %v832
    %v837 = vadd.f32 %v818, %v833
    %v838 = vrot.slane %v817, 4
    %v839 = vrot.slane %v818, 4
    %v842 = vadd.f32 %v836, %v838
    %v843 = vadd.f32 %v837, %v839
    %v844 = vrot.slane %v817, 6
    %v845 = vrot.slane %v818, 6
    %v848 = vadd.f32 %v842, %v844
    %v849 = vadd.f32 %v843, %v845
    %s850 = sld [smem:[#allocation2 + $0x28]]
    %v851 = vstv %s850
    %v852 = vadd.f32 %v848, %v851
    %v853 = vadd.f32 %v849, %v851
    %v854 = vxor.u32 %v852, 2147483648
    %v855 = vxor.u32 %v853, 2147483648
    %v856 = vmul.f32 %v854, 1.442695
    %v857 = vpow.pop %v856
    %v858 = vmul.f32 %v855, 1.442695
    %v859 = vpow.pop %v858
    %v860 = vadd.f32 %v857, 1.0
    %v861 = vadd.f32 %v859, 1.0
    %v862 = vrcp.pop %v860
    %v863 = vmul.f32 %v860, %v862
    %v864 = vsub.f32 1.0, %v863
    %v865 = vmul.f32 %v862, %v864
    %v866 = vadd.f32 %v862, %v865
    %vm867 = vweird.f32 %v860
    %vm868 = vweird.f32 %v862
    %vm869 = vmor %vm867, %vm868
    %v870 = vsel %vm869, %v862, %v866
    %v871 = vand.u32 2147483647, %v860
    %vm872 = vcmp.eq.f32.partialorder %v871, 8.507059e+37
    %v873 = vand.u32 %v860, 2147483648
    %v874 = vor.u32 1.1754944e-38, %v873
    %v875 = vsel %vm872, %v874, %v870
    %v876 = vmul.f32 1.0, %v875
    %v877 = vrcp.pop %v861
    %v878 = vmul.f32 %v861, %v877
    %v879 = vsub.f32 1.0, %v878
    %v880 = vmul.f32 %v877, %v879
    %v881 = vadd.f32 %v877, %v880
    %vm882 = vweird.f32 %v861
    %vm883 = vweird.f32 %v877
    %vm884 = vmor %vm882, %vm883
    %v885 = vsel %vm884, %v877, %v881
    %v886 = vand.u32 2147483647, %v861
    %vm887 = vcmp.eq.f32.partialorder %v886, 8.507059e+37
    %v888 = vand.u32 %v861, 2147483648
    %v889 = vor.u32 1.1754944e-38, %v888
    %v890 = vsel %vm887, %v889, %v885
    %v891 = vmul.f32 1.0, %v890
    %v894 = vrot.slane %v828, 2
    %v895 = vrot.slane %v829, 2
    %v898 = vadd.f32 %v828, %v894
    %v899 = vadd.f32 %v829, %v895
    %v900 = vrot.slane %v828, 4
    %v901 = vrot.slane %v829, 4
    %v904 = vadd.f32 %v898, %v900
    %v905 = vadd.f32 %v899, %v901
    %v906 = vrot.slane %v828, 6
    %v907 = vrot.slane %v829, 6
    %v910 = vadd.f32 %v904, %v906
    %v911 = vadd.f32 %v905, %v907
    %s912 = sld [smem:[#allocation2 + $0x29]]
    %v913 = vstv %s912
    %v914 = vadd.f32 %v910, %v913
    %v915 = vadd.f32 %v911, %v913
    %v916 = vxor.u32 %v914, 2147483648
    %v917 = vxor.u32 %v915, 2147483648
    %v918 = vmul.f32 %v916, 1.442695
    %v919 = vpow.pop %v918
    %v920 = vmul.f32 %v917, 1.442695
    %v921 = vpow.pop %v920
    %v922 = vadd.f32 %v919, 1.0
    %v923 = vadd.f32 %v921, 1.0
    %v924 = vrcp.pop %v922
    %v925 = vmul.f32 %v922, %v924
    %v926 = vsub.f32 1.0, %v925
    %v927 = vmul.f32 %v924, %v926
    %v928 = vadd.f32 %v924, %v927
    %vm929 = vweird.f32 %v922
    %vm930 = vweird.f32 %v924
    %vm931 = vmor %vm929, %vm930
    %v932 = vsel %vm931, %v924, %v928
    %v933 = vand.u32 2147483647, %v922
    %vm934 = vcmp.eq.f32.partialorder %v933, 8.507059e+37
    %v935 = vand.u32 %v922, 2147483648
    %v936 = vor.u32 1.1754944e-38, %v935
    %v937 = vsel %vm934, %v936, %v932
    %v938 = vmul.f32 1.0, %v937
    %v939 = vrcp.pop %v923
    %v940 = vmul.f32 %v923, %v939
    %v941 = vsub.f32 1.0, %v940
    %v942 = vmul.f32 %v939, %v941
    %v943 = vadd.f32 %v939, %v942
    %vm944 = vweird.f32 %v923
    %vm945 = vweird.f32 %v939
    %vm946 = vmor %vm944, %vm945
    %v947 = vsel %vm946, %v939, %v943
    %v948 = vand.u32 2147483647, %v923
    %vm949 = vcmp.eq.f32.partialorder %v948, 8.507059e+37
    %v950 = vand.u32 %v923, 2147483648
    %v951 = vor.u32 1.1754944e-38, %v950
    %v952 = vsel %vm949, %v951, %v947
    %v953 = vmul.f32 1.0, %v952
    %v954 = vperm.slane %v876, 0
    %v955 = vperm.slane %v891, 0
    %v956 = vmul.f32 %v32, %v954
    %v957 = vmul.f32 %v33, %v955
    %v958 = vperm.slane %v876, 1
    %v959 = vperm.slane %v891, 1
    %v960 = vmul.f32 %v32, %v958
    %v961 = vmul.f32 %v33, %v959
    %v962 = vsel %vm538, %v956, %v960
    %v963 = vsel %vm538, %v957, %v961
    %v964 = vperm.slane %v938, 0
    %v965 = vperm.slane %v953, 0
    %v966 = vmul.f32 %v34, %v964
    %v967 = vmul.f32 %v35, %v965
    %v968 = vperm.slane %v938, 1
    %v969 = vperm.slane %v953, 1
    %v970 = vmul.f32 %v34, %v968
    %v971 = vmul.f32 %v35, %v969
    %v972 = vsel %vm538, %v966, %v970
    %v973 = vsel %vm538, %v967, %v971
    %974 = vst [vmem:[%s4] sm:$0xff] %v962
    %975 = vst [vmem:[%s4 + $0x8] sm:$0xff] %v963
    %976 = vst [vmem:[%s5] sm:$0xff] %v972
    %977 = vst [vmem:[%s5 + $0x8] sm:$0xff] %v973
    // Predicated region
    $region22: #{rfam_forward.1} parent=1 // pred_check
      _
    $region23: #{rfam_forward.1} parent=1 // pred_check_branch
      %979 = sbr.rel (0) target = $region25
    $region24: #{rfam_forward.1} parent=1 // pred_region
      _
    $region25: #{rfam_forward.1} parent=1 // pred_fallthru
      _
    // Predicated region
    $region26: #{rfam_forward.1} parent=1 // pred_check
      _
    $region27: #{rfam_forward.1} parent=1 // pred_check_branch
      %981 = sbr.rel (0) target = $region29
    $region28: #{rfam_forward.1} parent=1 // pred_region
      _
    $region29: #{rfam_forward.1} parent=1 // pred_fallthru
      _
    // Predicated region
    $region30: #{rfam_forward.1} parent=1 // pred_check
      _
    $region31: #{rfam_forward.1} parent=1 // pred_check_branch
      %983 = sbr.rel (0) target = $region33
    $region32: #{rfam_forward.1} parent=1 // pred_region
      _
    $region33: #{rfam_forward.1} parent=1 // pred_fallthru
      _
    // Predicated region
    $region34: #{rfam_forward.1} parent=1 // pred_check
      _
    $region35: #{rfam_forward.1} parent=1 // pred_check_branch
      %985 = sbr.rel (0) target = $region37
    $region36: #{rfam_forward.1} parent=1 // pred_region
      _
    $region37: #{rfam_forward.1} parent=1 // pred_fallthru
      _
    %986 = vsyncpa [#allocation3], 1

</llo_original>
